<compile_context>
chip_gen: v7x
topology: tpu7x:2x2x1
jax: 0.10.0
libtpu: 0.0.40
codegen_flags: <defaults>
</compile_context>

<pallas_src>
import numpy as np
import jax
import jax.numpy as jnp
from jax import lax
from jax.experimental import pallas as pl
from jax.experimental.pallas import tpu as pltpu


def _round_up(n, m):
    return ((n + m - 1) // m) * m


def _vmem_capacity_bytes():
    try:
        return int(pltpu.get_tpu_info().vmem_capacity_bytes)
    except Exception:
        return 64 << 20  # conservative (v7x per-TensorCore)


# ------------------------------- kernel --------------------------------------
def mobius_decoder_kernel(x_ref, wmob_ref, wh_ref, bh_ref, wout_ref, bout_ref,
                          o_ref):
    """Whole decoder for one batch tile, fully resident in VMEM."""
    x = x_ref[...].astype(jnp.float32)                          # [TB, Z] (Z unpadded)

    # ---- MobiusLayer: mobius_matvec(W, x) on the Poincare ball (c = 1) ----
    # Divides -> EUP rsqrt; sqrt(a) recovered as a * rsqrt(a).
    x_sq = jnp.sum(x * x, axis=-1, keepdims=True)               # [TB, 1]
    inv_x_norm = lax.rsqrt(jnp.maximum(x_sq, 1e-15))
    x_norm = x_sq * inv_x_norm

    mx = jnp.dot(x, wmob_ref[...], preferred_element_type=jnp.float32)  # [TB, Hp]
    mx_sq = jnp.sum(mx * mx, axis=-1, keepdims=True)
    inv_mx_norm = lax.rsqrt(jnp.maximum(mx_sq, 1e-15))
    mx_norm = mx_sq * inv_mx_norm

    # artanh without a divide: 0.5*(log(1+y) - log(1-y)); x_norm >= 0 so only
    # the upper clamp is needed.
    y = jnp.minimum(x_norm, 1.0 - 1e-7)
    artanh = 0.5 * (jnp.log(1.0 + y) - jnp.log(1.0 - y))

    res = jnp.tanh(mx_norm * inv_x_norm * artanh) * (mx * inv_mx_norm)
    # mobius_matvec(W, x) is defined to be exactly 0 where W x == 0
    h = jnp.where(mx_sq == 0.0, 0.0, res)

    # activation (ReLU); Dropout is identity in eval mode
    h = jnp.maximum(h, 0.0)

    # ---- (n_hlayers - 1) hidden Linear + ReLU + Dropout(eval=id) layers ----
    wdt = wh_ref.dtype                                          # f32 or bf16 feed
    n_hidden = wh_ref.shape[0]                                  # static

    def layer(hh, w, b):
        out = jnp.dot(hh.astype(wdt), w, preferred_element_type=jnp.float32)
        return jnp.maximum(out + b, 0.0)                        # [1, Hp] broadcast

    if n_hidden <= 4:
        for i in range(n_hidden):                               # unrolled (small NH)
            h = layer(h, wh_ref[i], bh_ref[i])
    else:
        # deep decoders: bound live ranges, one layer's weights live at a time
        h = lax.fori_loop(0, n_hidden,
                          lambda i, hh: layer(hh, wh_ref[i], bh_ref[i]), h)

    # ---- output Linear ----
    out = jnp.dot(h.astype(wout_ref.dtype), wout_ref[...],
                  preferred_element_type=jnp.float32)
    o_ref[...] = (out + bout_ref[...]).astype(o_ref.dtype)      # [1, Xp] broadcast


# ------------------------------- wrapper --------------------------------------
def mobius_decoder(x, w_mob, w_hidden, b_hidden, w_out, b_out, *,
                   batch_tile=256, compute_dtype=jnp.bfloat16):
    """x:[B,Z]  w_mob:[Z,H]  w_hidden:[NH,H,H]  b_hidden:[NH,1,H]
       w_out:[H,X]  b_out:[1,X]  ->  [B,X]"""
    B, Z = x.shape
    Zw, H = w_mob.shape
    NH = w_hidden.shape[0]
    Hw, X = w_out.shape
    assert Zw == Z and Hw == H and NH >= 1

    f32 = jnp.float32
    # Lane-dense zero padding of the large feature dims only (Z stays unpadded:
    # full-dim blocks are legal and masked loads beat 32x wasted bandwidth).
    Hp, Xp = _round_up(H, 128), _round_up(X, 128)

    cdt_sz = np.dtype(compute_dtype).itemsize
    out_sz = np.dtype(x.dtype).itemsize

    # Grid-invariant weights are single-buffered (counted once). Biases pad to
    # 8 sublanes in VMEM.
    weight_bytes = (Z * Hp * 4 + NH * Hp * Hp * cdt_sz + NH * 8 * Hp * 4
                    + Hp * Xp * cdt_sz + 8 * Xp * 4)

    vmem_cap = _vmem_capacity_bytes()
    budget = int(0.75 * vmem_cap)

    # Batch tiling: at least 2 grid steps when possible (keeps both v7x TCs
    # busy); 256-row tiles for large batches (full MXU M on v6e/v7x); tiles are
    # multiples of 8 rows and capacity-checked against the VMEM budget.
    if B <= 8:
        tb = 8
    elif B <= batch_tile:
        tb = _round_up(-(-B // 2), 8)
    else:
        tb = batch_tile

    def _need(t):
        tile_io = t * Z * 4 + t * Xp * out_sz       # double-buffered per-tile IO
        return 2 * tile_io + weight_bytes + (2 << 20)

    while tb > 8 and _need(tb) > budget:
        tb = max(8, _round_up(tb // 2, 8))

    Bp = _round_up(B, tb)
    grid = (Bp // tb,)
    vmem_limit = int(min(max(_need(tb), 32 << 20), budget))

    # Padded / dtype-prepared operands (Mobius matmul stays f32; hidden/output
    # weight feeds default to bf16 with f32 accumulation).
    xp = jnp.zeros((Bp, Z), f32).at[:B, :].set(x.astype(f32))
    wm = jnp.zeros((Z, Hp), f32).at[:, :H].set(w_mob.astype(f32))
    wh = jnp.zeros((NH, Hp, Hp), compute_dtype).at[:, :H, :H].set(
        w_hidden.astype(compute_dtype))
    bh = jnp.zeros((NH, 1, Hp), f32).at[:, :, :H].set(b_hidden.astype(f32))
    wo = jnp.zeros((Hp, Xp), compute_dtype).at[:H, :X].set(
        w_out.astype(compute_dtype))
    bo = jnp.zeros((1, Xp), f32).at[:, :X].set(b_out.astype(f32))

    # Cost estimate from the TRUE (unpadded) dims.
    cost = pl.CostEstimate(
        flops=2 * B * (Z * H + NH * H * H + H * X),
        transcendentals=5 * B,
        bytes_accessed=int(B * Z * 4 + Z * H * 4 + NH * H * H * cdt_sz
                           + NH * H * 4 + H * X * cdt_sz + X * 4 + B * X * out_sz),
    )

    def build(single_buffer_weights):
        # Grid-invariant operands: single VMEM buffer (index_map is constant,
        # double-buffering would just double their footprint).
        kw = dict(pipeline_mode=pl.Buffered(1)) if single_buffer_weights else {}
        vmem = vmem_limit if single_buffer_weights else int(
            min(max(_need(tb) + weight_bytes, 32 << 20), budget))
        in_specs = [
            pl.BlockSpec((tb, Z), lambda i: (i, 0)),               # x tile
            pl.BlockSpec((Z, Hp), lambda i: (0, 0), **kw),         # mobius W
            pl.BlockSpec((NH, Hp, Hp), lambda i: (0, 0, 0), **kw),  # hidden Ws
            pl.BlockSpec((NH, 1, Hp), lambda i: (0, 0, 0), **kw),   # hidden bs
            pl.BlockSpec((Hp, Xp), lambda i: (0, 0), **kw),        # output W
            pl.BlockSpec((1, Xp), lambda i: (0, 0), **kw),         # output b
        ]
        return pl.pallas_call(
            mobius_decoder_kernel,
            out_shape=jax.ShapeDtypeStruct((Bp, Xp), x.dtype),
            grid_spec=pltpu.PrefetchScalarGridSpec(
                num_scalar_prefetch=0,
                grid=grid,
                in_specs=in_specs,
                out_specs=pl.BlockSpec((tb, Xp), lambda i: (i, 0)),
            ),
            compiler_params=pltpu.CompilerParams(
                dimension_semantics=("parallel",),
                vmem_limit_bytes=vmem),
            cost_estimate=cost,
        )

    try:
        out = build(True)(xp, wm, wh, bh, wo, bo)
    except Exception:
        # Fallback if this JAX build rejects pipeline_mode on pallas_call specs.
        out = build(False)(xp, wm, wh, bh, wo, bo)

    return out[:B, :X]


# ---------------------- pure-JAX reference for checking ----------------------
def reference(x, w_mob, w_hidden, b_hidden, w_out, b_out):
    x = x.astype(jnp.float32)
    x_norm = jnp.sqrt(jnp.maximum(jnp.sum(x * x, -1, keepdims=True), 1e-15))
    mx = x @ w_mob
    mx_sq = jnp.sum(mx * mx, -1, keepdims=True)
    mx_norm = jnp.sqrt(jnp.maximum(mx_sq, 1e-15))
    y = jnp.clip(x_norm, -1.0 + 1e-7, 1.0 - 1e-7)
    artanh = 0.5 * jnp.log((1.0 + y) / (1.0 - y))
    res = jnp.tanh(mx_norm / x_norm * artanh) * mx / mx_norm
    h = jnp.where(mx_sq == 0.0, 0.0, res)
    h = jnp.maximum(h, 0.0)
    for i in range(w_hidden.shape[0]):
        h = jnp.maximum(h @ w_hidden[i] + b_hidden[i], 0.0)
    return h @ w_out + b_out


if __name__ == "__main__":
    # Small config consistent with the module:
    #   latent_dim=4, output_dim=16, n_hlayers=3, hlayer_size=32,
    #   activation=ReLU, dropout=0.1 (eval -> identity), manifold=Poincare ball
    B, Z, H, X = 16, 4, 32, 16
    N_HLAYERS = 3

    key = jax.random.PRNGKey(0)
    kx, kmob, kwh, kbh, kwo, kbo = jax.random.split(key, 6)

    # embeddings live on the Poincare ball -> scale so ||x|| < 1
    x = 0.3 * jax.random.normal(kx, (B, Z), jnp.float32)

    # deterministic parameter init (stored as [in, out] for x @ W)
    w_mob = 0.2 * jax.random.normal(kmob, (Z, H), jnp.float32)
    w_hidden = 0.1 * jax.random.normal(kwh, (N_HLAYERS - 1, H, H), jnp.float32)
    b_hidden = 0.1 * jax.random.normal(kbh, (N_HLAYERS - 1, 1, H), jnp.float32)
    w_out = 0.1 * jax.random.normal(kwo, (H, X), jnp.float32)
    b_out = 0.1 * jax.random.normal(kbo, (1, X), jnp.float32)

    ref = reference(x, w_mob, w_hidden, b_hidden, w_out, b_out)

    # f32 weight path (tight check)
    out_f32 = mobius_decoder(x, w_mob, w_hidden, b_hidden, w_out, b_out,
                             compute_dtype=jnp.float32)
    out_f32 = jax.block_until_ready(out_f32)
    assert out_f32.shape == (B, X)
    assert jnp.allclose(out_f32, ref, atol=1e-4, rtol=1e-4), "f32 mismatch vs reference"

    # default path: bf16 weight feed (native MXU rate on v6e/v7x), looser tolerance
    out_bf16 = mobius_decoder(x, w_mob, w_hidden, b_hidden, w_out, b_out)
    out_bf16 = jax.block_until_ready(out_bf16)
    assert out_bf16.shape == (B, X)
    assert jnp.allclose(out_bf16, ref, atol=3e-2, rtol=3e-2), "bf16 mismatch vs reference"

    print("KERNEL_OK")
</pallas_src>

<mosaic_0001>
module attributes {stable_mosaic.version = 11 : i64} {
  func.func @mobius_decoder_kernel(%arg0: i32, %arg1: memref<8x4xf32, #tpu.memory_space<vmem>>, %arg2: memref<4x128xf32, #tpu.memory_space<vmem>>, %arg3: memref<2x128x128xf32, #tpu.memory_space<vmem>>, %arg4: memref<2x1x128xf32, #tpu.memory_space<vmem>>, %arg5: memref<128x128xf32, #tpu.memory_space<vmem>>, %arg6: memref<1x128xf32, #tpu.memory_space<vmem>>, %arg7: memref<8x128xf32, #tpu.memory_space<vmem>>) attributes {dimension_semantics = [#tpu.dimension_semantics<parallel>], iteration_bounds = array<i64: 2>, scalar_prefetch = 0 : i64, scratch_operands = 0 : i64, tpu.core_type = #tpu.core_type<tc>, window_params = [{transform_indices = @transform_0, window_bounds = array<i64: 8, 4>}, {pipeline_mode = #tpu.pipeline_mode<synchronous>, transform_indices = @transform_1, window_bounds = array<i64: 4, 128>}, {pipeline_mode = #tpu.pipeline_mode<synchronous>, transform_indices = @transform_2, window_bounds = array<i64: 2, 128, 128>}, {pipeline_mode = #tpu.pipeline_mode<synchronous>, transform_indices = @transform_3, window_bounds = array<i64: 2, 1, 128>}, {pipeline_mode = #tpu.pipeline_mode<synchronous>, transform_indices = @transform_4, window_bounds = array<i64: 128, 128>}, {pipeline_mode = #tpu.pipeline_mode<synchronous>, transform_indices = @transform_5, window_bounds = array<i64: 1, 128>}, {transform_indices = @transform_6, window_bounds = array<i64: 8, 128>}]} {
    %c0 = arith.constant 0 : index
    %c0_0 = arith.constant 0 : index
    %0 = vector.load %arg1[%c0, %c0_0] : memref<8x4xf32, #tpu.memory_space<vmem>>, vector<8x4xf32>
    %1 = arith.mulf %0, %0 : vector<8x4xf32>
    %cst = arith.constant dense<0.000000e+00> : vector<8xf32>
    %2 = vector.multi_reduction <add>, %1, %cst [1] : vector<8x4xf32> to vector<8xf32>
    %3 = vector.shape_cast %2 : vector<8xf32> to vector<8x1xf32>
    %cst_1 = arith.constant 1.000000e-15 : f32
    %4 = vector.broadcast %cst_1 : f32 to vector<8x1xf32>
    %5 = arith.maximumf %3, %4 : vector<8x1xf32>
    %6 = math.rsqrt %5 : vector<8x1xf32>
    %7 = arith.mulf %3, %6 : vector<8x1xf32>
    %c0_2 = arith.constant 0 : index
    %c0_3 = arith.constant 0 : index
    %8 = vector.load %arg2[%c0_2, %c0_3] : memref<4x128xf32, #tpu.memory_space<vmem>>, vector<4x128xf32>
    %cst_4 = arith.constant dense<0.000000e+00> : vector<8x128xf32>
    %9 = tpu.matmul %0, %8, %cst_4 {dimension_numbers = #tpu.dot_dimension_numbers<[1], [0], [0], [1], [0, 0, 1, 1], [], []>} : vector<8x4xf32>, vector<4x128xf32>, vector<8x128xf32> -> vector<8x128xf32>
    %10 = arith.mulf %9, %9 : vector<8x128xf32>
    %cst_5 = arith.constant dense<0.000000e+00> : vector<8xf32>
    %11 = vector.multi_reduction <add>, %10, %cst_5 [1] : vector<8x128xf32> to vector<8xf32>
    %12 = vector.shape_cast %11 : vector<8xf32> to vector<8x1xf32>
    %cst_6 = arith.constant 1.000000e-15 : f32
    %13 = vector.broadcast %cst_6 : f32 to vector<8x1xf32>
    %14 = arith.maximumf %12, %13 : vector<8x1xf32>
    %15 = math.rsqrt %14 : vector<8x1xf32>
    %16 = arith.mulf %12, %15 : vector<8x1xf32>
    %cst_7 = arith.constant 0.99999988 : f32
    %17 = vector.broadcast %cst_7 : f32 to vector<8x1xf32>
    %18 = arith.minimumf %7, %17 : vector<8x1xf32>
    %cst_8 = arith.constant 1.000000e+00 : f32
    %19 = vector.broadcast %cst_8 : f32 to vector<8x1xf32>
    %20 = arith.addf %19, %18 : vector<8x1xf32>
    %21 = math.log %20 : vector<8x1xf32>
    %cst_9 = arith.constant 1.000000e+00 : f32
    %22 = vector.broadcast %cst_9 : f32 to vector<8x1xf32>
    %23 = arith.subf %22, %18 : vector<8x1xf32>
    %24 = math.log %23 : vector<8x1xf32>
    %25 = arith.subf %21, %24 : vector<8x1xf32>
    %cst_10 = arith.constant 5.000000e-01 : f32
    %26 = vector.broadcast %cst_10 : f32 to vector<8x1xf32>
    %27 = arith.mulf %26, %25 : vector<8x1xf32>
    %28 = arith.mulf %16, %6 : vector<8x1xf32>
    %29 = arith.mulf %28, %27 : vector<8x1xf32>
    %30 = math.tanh %29 : vector<8x1xf32>
    %31 = vector.broadcast %15 : vector<8x1xf32> to vector<8x128xf32>
    %32 = arith.mulf %9, %31 : vector<8x128xf32>
    %33 = vector.broadcast %30 : vector<8x1xf32> to vector<8x128xf32>
    %34 = arith.mulf %33, %32 : vector<8x128xf32>
    %cst_11 = arith.constant 0.000000e+00 : f32
    %35 = vector.broadcast %cst_11 : f32 to vector<8x1xf32>
    %36 = arith.cmpf oeq, %12, %35 : vector<8x1xf32>
    %cst_12 = arith.constant 0.000000e+00 : f32
    %37 = vector.shape_cast %36 : vector<8x1xi1> to vector<8x1xi1>
    %38 = vector.broadcast %37 : vector<8x1xi1> to vector<8x128xi1>
    %39 = vector.broadcast %cst_12 : f32 to vector<8x128xf32>
    %40 = arith.select %38, %39, %34 : vector<8x128xi1>, vector<8x128xf32>
    %cst_13 = arith.constant 0.000000e+00 : f32
    %41 = vector.broadcast %cst_13 : f32 to vector<8x128xf32>
    %42 = arith.maximumf %40, %41 : vector<8x128xf32>
    %c0_14 = arith.constant 0 : index
    %c0_15 = arith.constant 0 : index
    %c0_16 = arith.constant 0 : index
    %43 = vector.load %arg3[%c0_14, %c0_15, %c0_16] : memref<2x128x128xf32, #tpu.memory_space<vmem>>, vector<1x128x128xf32>
    %44 = vector.shape_cast %43 : vector<1x128x128xf32> to vector<128x128xf32>
    %c0_17 = arith.constant 0 : index
    %c0_18 = arith.constant 0 : index
    %c0_19 = arith.constant 0 : index
    %45 = vector.load %arg4[%c0_17, %c0_18, %c0_19] : memref<2x1x128xf32, #tpu.memory_space<vmem>>, vector<1x1x128xf32>
    %46 = vector.shape_cast %45 : vector<1x1x128xf32> to vector<1x128xf32>
    %cst_20 = arith.constant dense<0.000000e+00> : vector<8x128xf32>
    %47 = tpu.matmul %42, %44, %cst_20 {dimension_numbers = #tpu.dot_dimension_numbers<[1], [0], [0], [1], [0, 0, 1, 1], [], []>} : vector<8x128xf32>, vector<128x128xf32>, vector<8x128xf32> -> vector<8x128xf32>
    %48 = vector.broadcast %46 : vector<1x128xf32> to vector<8x128xf32>
    %49 = arith.addf %47, %48 : vector<8x128xf32>
    %cst_21 = arith.constant 0.000000e+00 : f32
    %50 = vector.broadcast %cst_21 : f32 to vector<8x128xf32>
    %51 = arith.maximumf %49, %50 : vector<8x128xf32>
    %c1 = arith.constant 1 : index
    %c0_22 = arith.constant 0 : index
    %c0_23 = arith.constant 0 : index
    %52 = vector.load %arg3[%c1, %c0_22, %c0_23] : memref<2x128x128xf32, #tpu.memory_space<vmem>>, vector<1x128x128xf32>
    %53 = vector.shape_cast %52 : vector<1x128x128xf32> to vector<128x128xf32>
    %c1_24 = arith.constant 1 : index
    %c0_25 = arith.constant 0 : index
    %c0_26 = arith.constant 0 : index
    %54 = vector.load %arg4[%c1_24, %c0_25, %c0_26] : memref<2x1x128xf32, #tpu.memory_space<vmem>>, vector<1x1x128xf32>
    %55 = vector.shape_cast %54 : vector<1x1x128xf32> to vector<1x128xf32>
    %cst_27 = arith.constant dense<0.000000e+00> : vector<8x128xf32>
    %56 = tpu.matmul %51, %53, %cst_27 {dimension_numbers = #tpu.dot_dimension_numbers<[1], [0], [0], [1], [0, 0, 1, 1], [], []>} : vector<8x128xf32>, vector<128x128xf32>, vector<8x128xf32> -> vector<8x128xf32>
    %57 = vector.broadcast %55 : vector<1x128xf32> to vector<8x128xf32>
    %58 = arith.addf %56, %57 : vector<8x128xf32>
    %cst_28 = arith.constant 0.000000e+00 : f32
    %59 = vector.broadcast %cst_28 : f32 to vector<8x128xf32>
    %60 = arith.maximumf %58, %59 : vector<8x128xf32>
    %c0_29 = arith.constant 0 : index
    %c0_30 = arith.constant 0 : index
    %61 = vector.load %arg5[%c0_29, %c0_30] : memref<128x128xf32, #tpu.memory_space<vmem>>, vector<128x128xf32>
    %cst_31 = arith.constant dense<0.000000e+00> : vector<8x128xf32>
    %62 = tpu.matmul %60, %61, %cst_31 {dimension_numbers = #tpu.dot_dimension_numbers<[1], [0], [0], [1], [0, 0, 1, 1], [], []>} : vector<8x128xf32>, vector<128x128xf32>, vector<8x128xf32> -> vector<8x128xf32>
    %c0_32 = arith.constant 0 : index
    %c0_33 = arith.constant 0 : index
    %63 = vector.load %arg6[%c0_32, %c0_33] : memref<1x128xf32, #tpu.memory_space<vmem>>, vector<1x128xf32>
    %64 = vector.broadcast %63 : vector<1x128xf32> to vector<8x128xf32>
    %65 = arith.addf %62, %64 : vector<8x128xf32>
    %c0_34 = arith.constant 0 : index
    %c0_35 = arith.constant 0 : index
    %66 = vector.load %arg7[%c0_34, %c0_35] : memref<8x128xf32, #tpu.memory_space<vmem>>, vector<8x128xf32>
    tpu.vector_store %arg7[%c0_34, %c0_35], %65 {strides = array<i32>} : memref<8x128xf32, #tpu.memory_space<vmem>>, vector<8x128xf32>,
    return
  }
  func.func @transform_0(%arg0: i32) -> (i32, i32) {
    %c0_i32 = arith.constant 0 : i32
    %c0_i32_0 = arith.constant 0 : i32
    return %arg0, %c0_i32 : i32, i32
  }
  func.func @transform_1(%arg0: i32) -> (i32, i32) {
    %c0_i32 = arith.constant 0 : i32
    %c0_i32_0 = arith.constant 0 : i32
    %c0_i32_1 = arith.constant 0 : i32
    return %c0_i32, %c0_i32_0 : i32, i32
  }
  func.func @transform_2(%arg0: i32) -> (i32, i32, i32) {
    %c0_i32 = arith.constant 0 : i32
    %c0_i32_0 = arith.constant 0 : i32
    %c0_i32_1 = arith.constant 0 : i32
    %c0_i32_2 = arith.constant 0 : i32
    return %c0_i32, %c0_i32_0, %c0_i32_1 : i32, i32, i32
  }
  func.func @transform_3(%arg0: i32) -> (i32, i32, i32) {
    %c0_i32 = arith.constant 0 : i32
    %c0_i32_0 = arith.constant 0 : i32
    %c0_i32_1 = arith.constant 0 : i32
    %c0_i32_2 = arith.constant 0 : i32
    return %c0_i32, %c0_i32_0, %c0_i32_1 : i32, i32, i32
  }
  func.func @transform_4(%arg0: i32) -> (i32, i32) {
    %c0_i32 = arith.constant 0 : i32
    %c0_i32_0 = arith.constant 0 : i32
    %c0_i32_1 = arith.constant 0 : i32
    return %c0_i32, %c0_i32_0 : i32, i32
  }
  func.func @transform_5(%arg0: i32) -> (i32, i32) {
    %c0_i32 = arith.constant 0 : i32
    %c0_i32_0 = arith.constant 0 : i32
    %c0_i32_1 = arith.constant 0 : i32
    return %c0_i32, %c0_i32_0 : i32, i32
  }
  func.func @transform_6(%arg0: i32) -> (i32, i32) {
    %c0_i32 = arith.constant 0 : i32
    %c0_i32_0 = arith.constant 0 : i32
    return %arg0, %c0_i32 : i32, i32
  }
}

module attributes {stable_mosaic.version = 11 : i64} {
  func.func @mobius_decoder_kernel(%arg0: i32, %arg1: memref<8x4xf32, #tpu.memory_space<vmem>>, %arg2: memref<4x128xf32, #tpu.memory_space<vmem>>, %arg3: memref<2x128x128xf32, #tpu.memory_space<vmem>>, %arg4: memref<2x1x128xf32, #tpu.memory_space<vmem>>, %arg5: memref<128x128xf32, #tpu.memory_space<vmem>>, %arg6: memref<1x128xf32, #tpu.memory_space<vmem>>, %arg7: memref<8x128xf32, #tpu.memory_space<vmem>>) attributes {dimension_semantics = [#tpu.dimension_semantics<parallel>], iteration_bounds = array<i64: 2>, scalar_prefetch = 0 : i64, scratch_operands = 0 : i64, tpu.core_type = #tpu.core_type<tc>, window_params = [{transform_indices = @transform_0, window_bounds = array<i64: 8, 4>}, {pipeline_mode = #tpu.pipeline_mode<synchronous>, transform_indices = @transform_1, window_bounds = array<i64: 4, 128>}, {pipeline_mode = #tpu.pipeline_mode<synchronous>, transform_indices = @transform_2, window_bounds = array<i64: 2, 128, 128>}, {pipeline_mode = #tpu.pipeline_mode<synchronous>, transform_indices = @transform_3, window_bounds = array<i64: 2, 1, 128>}, {pipeline_mode = #tpu.pipeline_mode<synchronous>, transform_indices = @transform_4, window_bounds = array<i64: 128, 128>}, {pipeline_mode = #tpu.pipeline_mode<synchronous>, transform_indices = @transform_5, window_bounds = array<i64: 1, 128>}, {transform_indices = @transform_6, window_bounds = array<i64: 8, 128>}]} {
    %c0 = arith.constant 0 : index
    %c0_0 = arith.constant 0 : index
    %0 = vector.load %arg1[%c0, %c0_0] : memref<8x4xf32, #tpu.memory_space<vmem>>, vector<8x4xf32>
    %1 = arith.mulf %0, %0 : vector<8x4xf32>
    %cst = arith.constant dense<0.000000e+00> : vector<8xf32>
    %2 = vector.multi_reduction <add>, %1, %cst [1] : vector<8x4xf32> to vector<8xf32>
    %3 = vector.shape_cast %2 : vector<8xf32> to vector<8x1xf32>
    %cst_1 = arith.constant 1.000000e-15 : f32
    %4 = vector.broadcast %cst_1 : f32 to vector<8x1xf32>
    %5 = arith.maximumf %3, %4 : vector<8x1xf32>
    %6 = math.rsqrt %5 : vector<8x1xf32>
    %7 = arith.mulf %3, %6 : vector<8x1xf32>
    %c0_2 = arith.constant 0 : index
    %c0_3 = arith.constant 0 : index
    %8 = vector.load %arg2[%c0_2, %c0_3] : memref<4x128xf32, #tpu.memory_space<vmem>>, vector<4x128xf32>
    %cst_4 = arith.constant dense<0.000000e+00> : vector<8x128xf32>
    %9 = tpu.matmul %0, %8, %cst_4 {dimension_numbers = #tpu.dot_dimension_numbers<[1], [0], [0], [1], [0, 0, 1, 1], [], []>} : vector<8x4xf32>, vector<4x128xf32>, vector<8x128xf32> -> vector<8x128xf32>
    %10 = arith.mulf %9, %9 : vector<8x128xf32>
    %cst_5 = arith.constant dense<0.000000e+00> : vector<8xf32>
    %11 = vector.multi_reduction <add>, %10, %cst_5 [1] : vector<8x128xf32> to vector<8xf32>
    %12 = vector.shape_cast %11 : vector<8xf32> to vector<8x1xf32>
    %cst_6 = arith.constant 1.000000e-15 : f32
    %13 = vector.broadcast %cst_6 : f32 to vector<8x1xf32>
    %14 = arith.maximumf %12, %13 : vector<8x1xf32>
    %15 = math.rsqrt %14 : vector<8x1xf32>
    %16 = arith.mulf %12, %15 : vector<8x1xf32>
    %cst_7 = arith.constant 0.99999988 : f32
    %17 = vector.broadcast %cst_7 : f32 to vector<8x1xf32>
    %18 = arith.minimumf %7, %17 : vector<8x1xf32>
    %cst_8 = arith.constant 1.000000e+00 : f32
    %19 = vector.broadcast %cst_8 : f32 to vector<8x1xf32>
    %20 = arith.addf %19, %18 : vector<8x1xf32>
    %21 = math.log %20 : vector<8x1xf32>
    %cst_9 = arith.constant 1.000000e+00 : f32
    %22 = vector.broadcast %cst_9 : f32 to vector<8x1xf32>
    %23 = arith.subf %22, %18 : vector<8x1xf32>
    %24 = math.log %23 : vector<8x1xf32>
    %25 = arith.subf %21, %24 : vector<8x1xf32>
    %cst_10 = arith.constant 5.000000e-01 : f32
    %26 = vector.broadcast %cst_10 : f32 to vector<8x1xf32>
    %27 = arith.mulf %26, %25 : vector<8x1xf32>
    %28 = arith.mulf %16, %6 : vector<8x1xf32>
    %29 = arith.mulf %28, %27 : vector<8x1xf32>
    %30 = math.tanh %29 : vector<8x1xf32>
    %31 = vector.broadcast %15 : vector<8x1xf32> to vector<8x128xf32>
    %32 = arith.mulf %9, %31 : vector<8x128xf32>
    %33 = vector.broadcast %30 : vector<8x1xf32> to vector<8x128xf32>
    %34 = arith.mulf %33, %32 : vector<8x128xf32>
    %cst_11 = arith.constant 0.000000e+00 : f32
    %35 = vector.broadcast %cst_11 : f32 to vector<8x1xf32>
    %36 = arith.cmpf oeq, %12, %35 : vector<8x1xf32>
    %cst_12 = arith.constant 0.000000e+00 : f32
    %37 = vector.shape_cast %36 : vector<8x1xi1> to vector<8x1xi1>
    %38 = vector.broadcast %37 : vector<8x1xi1> to vector<8x128xi1>
    %39 = vector.broadcast %cst_12 : f32 to vector<8x128xf32>
    %40 = arith.select %38, %39, %34 : vector<8x128xi1>, vector<8x128xf32>
    %cst_13 = arith.constant 0.000000e+00 : f32
    %41 = vector.broadcast %cst_13 : f32 to vector<8x128xf32>
    %42 = arith.maximumf %40, %41 : vector<8x128xf32>
    %c0_14 = arith.constant 0 : index
    %c0_15 = arith.constant 0 : index
    %c0_16 = arith.constant 0 : index
    %43 = vector.load %arg3[%c0_14, %c0_15, %c0_16] : memref<2x128x128xf32, #tpu.memory_space<vmem>>, vector<1x128x128xf32>
    %44 = vector.shape_cast %43 : vector<1x128x128xf32> to vector<128x128xf32>
    %c0_17 = arith.constant 0 : index
    %c0_18 = arith.constant 0 : index
    %c0_19 = arith.constant 0 : index
    %45 = vector.load %arg4[%c0_17, %c0_18, %c0_19] : memref<2x1x128xf32, #tpu.memory_space<vmem>>, vector<1x1x128xf32>
    %46 = vector.shape_cast %45 : vector<1x1x128xf32> to vector<1x128xf32>
    %cst_20 = arith.constant dense<0.000000e+00> : vector<8x128xf32>
    %47 = tpu.matmul %42, %44, %cst_20 {dimension_numbers = #tpu.dot_dimension_numbers<[1], [0], [0], [1], [0, 0, 1, 1], [], []>} : vector<8x128xf32>, vector<128x128xf32>, vector<8x128xf32> -> vector<8x128xf32>
    %48 = vector.broadcast %46 : vector<1x128xf32> to vector<8x128xf32>
    %49 = arith.addf %47, %48 : vector<8x128xf32>
    %cst_21 = arith.constant 0.000000e+00 : f32
    %50 = vector.broadcast %cst_21 : f32 to vector<8x128xf32>
    %51 = arith.maximumf %49, %50 : vector<8x128xf32>
    %c1 = arith.constant 1 : index
    %c0_22 = arith.constant 0 : index
    %c0_23 = arith.constant 0 : index
    %52 = vector.load %arg3[%c1, %c0_22, %c0_23] : memref<2x128x128xf32, #tpu.memory_space<vmem>>, vector<1x128x128xf32>
    %53 = vector.shape_cast %52 : vector<1x128x128xf32> to vector<128x128xf32>
    %c1_24 = arith.constant 1 : index
    %c0_25 = arith.constant 0 : index
    %c0_26 = arith.constant 0 : index
    %54 = vector.load %arg4[%c1_24, %c0_25, %c0_26] : memref<2x1x128xf32, #tpu.memory_space<vmem>>, vector<1x1x128xf32>
    %55 = vector.shape_cast %54 : vector<1x1x128xf32> to vector<1x128xf32>
    %cst_27 = arith.constant dense<0.000000e+00> : vector<8x128xf32>
    %56 = tpu.matmul %51, %53, %cst_27 {dimension_numbers = #tpu.dot_dimension_numbers<[1], [0], [0], [1], [0, 0, 1, 1], [], []>} : vector<8x128xf32>, vector<128x128xf32>, vector<8x128xf32> -> vector<8x128xf32>
    %57 = vector.broadcast %55 : vector<1x128xf32> to vector<8x128xf32>
    %58 = arith.addf %56, %57 : vector<8x128xf32>
    %cst_28 = arith.constant 0.000000e+00 : f32
    %59 = vector.broadcast %cst_28 : f32 to vector<8x128xf32>
    %60 = arith.maximumf %58, %59 : vector<8x128xf32>
    %c0_29 = arith.constant 0 : index
    %c0_30 = arith.constant 0 : index
    %61 = vector.load %arg5[%c0_29, %c0_30] : memref<128x128xf32, #tpu.memory_space<vmem>>, vector<128x128xf32>
    %cst_31 = arith.constant dense<0.000000e+00> : vector<8x128xf32>
    %62 = tpu.matmul %60, %61, %cst_31 {dimension_numbers = #tpu.dot_dimension_numbers<[1], [0], [0], [1], [0, 0, 1, 1], [], []>} : vector<8x128xf32>, vector<128x128xf32>, vector<8x128xf32> -> vector<8x128xf32>
    %c0_32 = arith.constant 0 : index
    %c0_33 = arith.constant 0 : index
    %63 = vector.load %arg6[%c0_32, %c0_33] : memref<1x128xf32, #tpu.memory_space<vmem>>, vector<1x128xf32>
    %64 = vector.broadcast %63 : vector<1x128xf32> to vector<8x128xf32>
    %65 = arith.addf %62, %64 : vector<8x128xf32>
    %c0_34 = arith.constant 0 : index
    %c0_35 = arith.constant 0 : index
    %66 = vector.load %arg7[%c0_34, %c0_35] : memref<8x128xf32, #tpu.memory_space<vmem>>, vector<8x128xf32>
    tpu.vector_store %arg7[%c0_34, %c0_35], %65 {strides = array<i32>} : memref<8x128xf32, #tpu.memory_space<vmem>>, vector<8x128xf32>,
    return
  }
  func.func @transform_0(%arg0: i32) -> (i32, i32) {
    %c0_i32 = arith.constant 0 : i32
    %c0_i32_0 = arith.constant 0 : i32
    return %arg0, %c0_i32 : i32, i32
  }
  func.func @transform_1(%arg0: i32) -> (i32, i32) {
    %c0_i32 = arith.constant 0 : i32
    %c0_i32_0 = arith.constant 0 : i32
    %c0_i32_1 = arith.constant 0 : i32
    return %c0_i32, %c0_i32_0 : i32, i32
  }
  func.func @transform_2(%arg0: i32) -> (i32, i32, i32) {
    %c0_i32 = arith.constant 0 : i32
    %c0_i32_0 = arith.constant 0 : i32
    %c0_i32_1 = arith.constant 0 : i32
    %c0_i32_2 = arith.constant 0 : i32
    return %c0_i32, %c0_i32_0, %c0_i32_1 : i32, i32, i32
  }
  func.func @transform_3(%arg0: i32) -> (i32, i32, i32) {
    %c0_i32 = arith.constant 0 : i32
    %c0_i32_0 = arith.constant 0 : i32
    %c0_i32_1 = arith.constant 0 : i32
    %c0_i32_2 = arith.constant 0 : i32
    return %c0_i32, %c0_i32_0, %c0_i32_1 : i32, i32, i32
  }
  func.func @transform_4(%arg0: i32) -> (i32, i32) {
    %c0_i32 = arith.constant 0 : i32
    %c0_i32_0 = arith.constant 0 : i32
    %c0_i32_1 = arith.constant 0 : i32
    return %c0_i32, %c0_i32_0 : i32, i32
  }
  func.func @transform_5(%arg0: i32) -> (i32, i32) {
    %c0_i32 = arith.constant 0 : i32
    %c0_i32_0 = arith.constant 0 : i32
    %c0_i32_1 = arith.constant 0 : i32
    return %c0_i32, %c0_i32_0 : i32, i32
  }
  func.func @transform_6(%arg0: i32) -> (i32, i32) {
    %c0_i32 = arith.constant 0 : i32
    %c0_i32_0 = arith.constant 0 : i32
    return %arg0, %c0_i32 : i32, i32
  }
}

</mosaic_0001>

<llo_original>
// kernel: tpu_custom_call.1
$region0: #{tpu_custom_call.1}
  #allocation0 [shape = 'u32[]', space=smem, size = 0x4, offset = 0x4, fixed_abs, tag = 'smem constant byte address 0x4 - core index']
  #allocation1 [shape = 'u32[144,128]{1,0:T(1,128)}', space=vmem, size = 0x12000, scoped, tag = 'internal scratch']
  %s0 = inlined_call_operand.vmem [shape: f32[16,4], index: 0, kind: input, shape index: {}]
  %s1 = inlined_call_operand.vmem [shape: f32[4,128], index: 1, kind: input, shape index: {}]
  %s2 = inlined_call_operand.hbm [shape: f32[2,128,128], index: 2, kind: input, shape index: {}]
  %s3 = inlined_call_operand.vmem [shape: f32[2,1,128], index: 3, kind: input, shape index: {}]
  %s4 = inlined_call_operand.hbm [shape: f32[128,128], index: 4, kind: input, shape index: {}]
  %s5 = inlined_call_operand.vmem [shape: f32[1,128], index: 5, kind: input, shape index: {}]
  %s6 = inlined_call_operand.hbm [shape: f32[16,128], index: 6, kind: output, shape index: {}]
  %s7 = sld [smem:[#allocation0]]
  $region65: #{tpu_custom_call.1} parent=0
    _
  %s9 = ssub.s32 1, %s7
  %s10 = scalar_select 0, %s9, %s7
  $region1: #{tpu_custom_call.1} parent=0
    #allocation2 [shape = 'u8[131072]{0}', space=vmem, size = 0x20000, scoped, tag = 'input window, operand 2, single buffered']
    #allocation3 [shape = 's32[2]{0}', space=sflag, size = 0x8, scoped, tag = 'scoped memory for tpu_custom_call.1']
    #allocation4 [shape = 's32[2]{0}', space=sflag, size = 0x8, scoped, tag = 'scoped memory for tpu_custom_call.1']
    #allocation5 [shape = 'u8[65536]{0}', space=vmem, size = 0x10000, scoped, tag = 'input window, operand 4, single buffered']
    #allocation6 [shape = 's32[1]{0}', space=sflag, size = 0x4, scoped, tag = 'scoped memory for tpu_custom_call.1']
    #allocation7 [shape = 'u8[8192]{0}', space=vmem, size = 0x2000, scoped, tag = 'output window, operand 0']
    %11 = vsyncpa [#allocation3], 0
    %12 = vsyncpa [#allocation6], 0
    %13 = vsyncpa [#allocation4], 0
    %s14 = scalar_lea.sflag [#allocation4], 1
    %15 = vsyncpa %s14, 0
    loop: start=0, step=1, limit=4
    $region2: #{tpu_custom_call.1} parent=1 // loop_pre_header
      _
    $region3: #{tpu_custom_call.1} parent=1 // loop_header
      %s17 = sphi 0, %s21
      %p18 = scmp.ge.s32.totalorder %s17, 4
      %s27 = sphi 0, %s29
      %s30 = sphi 0, %s27
      %s31 = sphi 0, %s30
      %s47 = sphi 0, %s31
      %s51 = sphi 0, %s51
      %s53 = sphi 0, %s51
      %s54 = sphi 0, %s53
      %s68 = sphi 0, %s54
      %s72 = sphi 0, %s72
      %s74 = sphi 0, %s72
      %s75 = sphi 0, %s74
      %s89 = sphi 0, %s75
      %s93 = sphi 0, %s93
      %s95 = sphi 0, %s93
      %s96 = sphi 0, %s95
      %s110 = sphi 0, %s96
      %s114 = sphi 0, %s114
      %s116 = sphi 0, %s114
      %s117 = sphi 0, %s116
      %s131 = sphi 0, %s117
      %s135 = sphi 0, %s135
      %s137 = sphi 0, %s135
      %s138 = sphi 0, %s137
      %s152 = sphi 0, %s138
      %s158 = sphi 0, %s160
      %s161 = sphi 0, %s158
      %s162 = sphi 0, %s161
      %s178 = sphi 0, %s162
    $region4: #{tpu_custom_call.1} parent=1 // loop_header_branch
      %20 = sbr.rel (%p18) target = $region8
    $region5: #{tpu_custom_call.1} parent=1 // loop_body
      %s22 = ssub.s32 %s17, 1
      %s23 = ssub.s32 %s17, 2
      %s24 = sadd.s32 %s17, 1
      %s25 = ssub.s32 %s17, %s24
      %p26 = scmp.eq.s32.totalorder %s25, 0
      %s28 = sadd.s32 %s27, 1
      %s29 = scalar_select %p26, %s27, %s28
      %p32 = pneg %p26
      %p33 = scmp.eq.s32.totalorder %s17, 1
      %p34 = por %p32, %p33
      %p35 = scmp.ne.s32.totalorder %s27, %s30
      %p36 = scmp.eq.s32.totalorder %s17, 0
      %p37 = por %p35, %p36
      %p38 = scmp.ne.s32.totalorder %s27, %s30
      %p39 = scmp.eq.s32.totalorder %s22, 1
      %p40 = por %p38, %p39
      %p41 = scmp.ne.s32.totalorder %s30, %s31
      %p42 = scmp.eq.s32.totalorder %s22, 0
      %p43 = por %p41, %p42
      %p44 = scmp.ne.s32.totalorder %s30, %s31
      %p45 = scmp.eq.s32.totalorder %s23, 1
      %p46 = por %p44, %p45
      %p48 = scmp.ne.s32.totalorder %s31, %s47
      %p49 = scmp.eq.s32.totalorder %s23, 0
      %p50 = por %p48, %p49
      %s52 = sadd.s32 %s51, 1
      %p55 = scmp.eq.s32.totalorder %s17, 1
      %p56 = scmp.ne.s32.totalorder %s51, %s53
      %p57 = scmp.eq.s32.totalorder %s17, 0
      %p58 = por %p56, %p57
      %p59 = scmp.ne.s32.totalorder %s51, %s53
      %p60 = scmp.eq.s32.totalorder %s22, 1
      %p61 = por %p59, %p60
      %p62 = scmp.ne.s32.totalorder %s53, %s54
      %p63 = scmp.eq.s32.totalorder %s22, 0
      %p64 = por %p62, %p63
      %p65 = scmp.ne.s32.totalorder %s53, %s54
      %p66 = scmp.eq.s32.totalorder %s23, 1
      %p67 = por %p65, %p66
      %p69 = scmp.ne.s32.totalorder %s54, %s68
      %p70 = scmp.eq.s32.totalorder %s23, 0
      %p71 = por %p69, %p70
      %s73 = sadd.s32 %s72, 1
      %p76 = scmp.eq.s32.totalorder %s17, 1
      %p77 = scmp.ne.s32.totalorder %s72, %s74
      %p78 = scmp.eq.s32.totalorder %s17, 0
      %p79 = por %p77, %p78
      %p80 = scmp.ne.s32.totalorder %s72, %s74
      %p81 = scmp.eq.s32.totalorder %s22, 1
      %p82 = por %p80, %p81
      %p83 = scmp.ne.s32.totalorder %s74, %s75
      %p84 = scmp.eq.s32.totalorder %s22, 0
      %p85 = por %p83, %p84
      %p86 = scmp.ne.s32.totalorder %s74, %s75
      %p87 = scmp.eq.s32.totalorder %s23, 1
      %p88 = por %p86, %p87
      %p90 = scmp.ne.s32.totalorder %s75, %s89
      %p91 = scmp.eq.s32.totalorder %s23, 0
      %p92 = por %p90, %p91
      %s94 = sadd.s32 %s93, 1
      %p97 = scmp.eq.s32.totalorder %s17, 1
      %p98 = scmp.ne.s32.totalorder %s93, %s95
      %p99 = scmp.eq.s32.totalorder %s17, 0
      %p100 = por %p98, %p99
      %p101 = scmp.ne.s32.totalorder %s93, %s95
      %p102 = scmp.eq.s32.totalorder %s22, 1
      %p103 = por %p101, %p102
      %p104 = scmp.ne.s32.totalorder %s95, %s96
      %p105 = scmp.eq.s32.totalorder %s22, 0
      %p106 = por %p104, %p105
      %p107 = scmp.ne.s32.totalorder %s95, %s96
      %p108 = scmp.eq.s32.totalorder %s23, 1
      %p109 = por %p107, %p108
      %p111 = scmp.ne.s32.totalorder %s96, %s110
      %p112 = scmp.eq.s32.totalorder %s23, 0
      %p113 = por %p111, %p112
      %s115 = sadd.s32 %s114, 1
      %p118 = scmp.eq.s32.totalorder %s17, 1
      %p119 = scmp.ne.s32.totalorder %s114, %s116
      %p120 = scmp.eq.s32.totalorder %s17, 0
      %p121 = por %p119, %p120
      %p122 = scmp.ne.s32.totalorder %s114, %s116
      %p123 = scmp.eq.s32.totalorder %s22, 1
      %p124 = por %p122, %p123
      %p125 = scmp.ne.s32.totalorder %s116, %s117
      %p126 = scmp.eq.s32.totalorder %s22, 0
      %p127 = por %p125, %p126
      %p128 = scmp.ne.s32.totalorder %s116, %s117
      %p129 = scmp.eq.s32.totalorder %s23, 1
      %p130 = por %p128, %p129
      %p132 = scmp.ne.s32.totalorder %s117, %s131
      %p133 = scmp.eq.s32.totalorder %s23, 0
      %p134 = por %p132, %p133
      %s136 = sadd.s32 %s135, 1
      %p139 = scmp.eq.s32.totalorder %s17, 1
      %p140 = scmp.ne.s32.totalorder %s135, %s137
      %p141 = scmp.eq.s32.totalorder %s17, 0
      %p142 = por %p140, %p141
      %p143 = scmp.ne.s32.totalorder %s135, %s137
      %p144 = scmp.eq.s32.totalorder %s22, 1
      %p145 = por %p143, %p144
      %p146 = scmp.ne.s32.totalorder %s137, %s138
      %p147 = scmp.eq.s32.totalorder %s22, 0
      %p148 = por %p146, %p147
      %p149 = scmp.ne.s32.totalorder %s137, %s138
      %p150 = scmp.eq.s32.totalorder %s23, 1
      %p151 = por %p149, %p150
      %p153 = scmp.ne.s32.totalorder %s138, %s152
      %p154 = scmp.eq.s32.totalorder %s23, 0
      %p155 = por %p153, %p154
      %s156 = ssub.s32 %s17, %s24
      %p157 = scmp.eq.s32.totalorder %s156, 0
      %s159 = sadd.s32 %s158, 1
      %s160 = scalar_select %p157, %s158, %s159
      %p163 = pneg %p157
      %p164 = scmp.eq.s32.totalorder %s17, 1
      %p165 = por %p163, %p164
      %p166 = scmp.ne.s32.totalorder %s158, %s161
      %p167 = scmp.eq.s32.totalorder %s17, 0
      %p168 = por %p166, %p167
      %p169 = scmp.ne.s32.totalorder %s158, %s161
      %p170 = scmp.eq.s32.totalorder %s22, 1
      %p171 = por %p169, %p170
      %p172 = scmp.ne.s32.totalorder %s161, %s162
      %p173 = scmp.eq.s32.totalorder %s22, 0
      %p174 = por %p172, %p173
      %p175 = scmp.ne.s32.totalorder %s161, %s162
      %p176 = scmp.eq.s32.totalorder %s23, 1
      %p177 = por %p175, %p176
      %p179 = scmp.ne.s32.totalorder %s162, %s178
      %p180 = scmp.eq.s32.totalorder %s23, 0
      %p181 = por %p179, %p180
      %p182 = scmp.le.s32.totalorder 1, %s17
      %p183 = scmp.lt.s32.totalorder %s17, 3
      %p184 = pnand %p182, %p183
      %p185 = pneg %p184
      // Predicated region
      $region9: #{tpu_custom_call.1} parent=5 // pred_check
        _
      $region10: #{tpu_custom_call.1} parent=5 // pred_check_branch
        %187 = sbr.rel (%p184) target = $region12
      $region11: #{tpu_custom_call.1} parent=5 // pred_region
        %s188 = ssub.s32 %s17, 1
        // Predicated region
        $region13: #{tpu_custom_call.1} parent=11 // pred_check
          %p189 = pneg %p64
        $region14: #{tpu_custom_call.1} parent=11 // pred_check_branch
          %191 = sbr.rel (%p189) target = $region16
        $region15: #{tpu_custom_call.1} parent=11 // pred_region
          _
        $region16: #{tpu_custom_call.1} parent=11 // pred_fallthru
          _
        // Predicated region
        $region17: #{tpu_custom_call.1} parent=11 // pred_check
          %p192 = pneg %p85
        $region18: #{tpu_custom_call.1} parent=11 // pred_check_branch
          %194 = sbr.rel (%p192) target = $region20
        $region19: #{tpu_custom_call.1} parent=11 // pred_region
          %s196 = ssub.s32 4096, 4096
          %197 = vsyncadd [#allocation3], %s196
          %s198 = sshll.u32 [#allocation2], 4
          %s199 = int_to_ptr.vmem [resolvable:$true] %s198
          %204 = dma.hbm_to_vmem [thread:$0]  %s2, 4096, %s199, [#allocation3], 128, 128, 8
        $region20: #{tpu_custom_call.1} parent=11 // pred_fallthru
          _
        // Predicated region
        $region21: #{tpu_custom_call.1} parent=11 // pred_check
          %p205 = pneg %p106
        $region22: #{tpu_custom_call.1} parent=11 // pred_check_branch
          %207 = sbr.rel (%p205) target = $region24
        $region23: #{tpu_custom_call.1} parent=11 // pred_region
          _
        $region24: #{tpu_custom_call.1} parent=11 // pred_fallthru
          _
        // Predicated region
        $region25: #{tpu_custom_call.1} parent=11 // pred_check
          %p208 = pneg %p127
        $region26: #{tpu_custom_call.1} parent=11 // pred_check_branch
          %210 = sbr.rel (%p208) target = $region28
        $region27: #{tpu_custom_call.1} parent=11 // pred_region
          %s212 = ssub.s32 2048, 2048
          %213 = vsyncadd [#allocation6], %s212
          %s214 = sshll.u32 [#allocation5], 4
          %s215 = int_to_ptr.vmem [resolvable:$true] %s214
          %220 = dma.hbm_to_vmem [thread:$0]  %s4, 2048, %s215, [#allocation6], 128, 128, 8
        $region28: #{tpu_custom_call.1} parent=11 // pred_fallthru
          _
        // Predicated region
        $region29: #{tpu_custom_call.1} parent=11 // pred_check
          %p221 = pneg %p148
        $region30: #{tpu_custom_call.1} parent=11 // pred_check_branch
          %223 = sbr.rel (%p221) target = $region32
        $region31: #{tpu_custom_call.1} parent=11 // pred_region
          _
        $region32: #{tpu_custom_call.1} parent=11 // pred_fallthru
          _
      $region12: #{tpu_custom_call.1} parent=5 // pred_fallthru
        _
      %p224 = scmp.lt.s32.totalorder %s17, 2
      // Predicated region
      $region33: #{tpu_custom_call.1} parent=5 // pred_check
        %p225 = pneg %p224
      $region34: #{tpu_custom_call.1} parent=5 // pred_check_branch
        %227 = sbr.rel (%p225) target = $region36
      $region35: #{tpu_custom_call.1} parent=5 // pred_region
        // Predicated region
        $region37: #{tpu_custom_call.1} parent=35 // pred_check
          %p228 = pneg %p37
        $region38: #{tpu_custom_call.1} parent=35 // pred_check_branch
          %230 = sbr.rel (%p228) target = $region40
        $region39: #{tpu_custom_call.1} parent=35 // pred_region
          %p231 = scmp.lt.s32.totalorder %s17, 1
          %s232 = scalar_select %p231, %s17, 1
          %s233 = smul.addr %s232, 8
          %s234 = scalar_lea.vmem %s0, %s233
        $region40: #{tpu_custom_call.1} parent=35 // pred_fallthru
          _
      $region36: #{tpu_custom_call.1} parent=5 // pred_fallthru
        _
      %p235 = scmp.le.s32.totalorder 1, %s17
      %p236 = scmp.lt.s32.totalorder %s17, 3
      %p237 = pnand %p235, %p236
      %p238 = pneg %p237
      // Predicated region
      $region41: #{tpu_custom_call.1} parent=5 // pred_check
        _
      $region42: #{tpu_custom_call.1} parent=5 // pred_check_branch
        %240 = sbr.rel (%p237) target = $region44
      $region43: #{tpu_custom_call.1} parent=5 // pred_region
        %s241 = ssub.s32 %s17, 1
        // Predicated region
        $region45: #{tpu_custom_call.1} parent=43 // pred_check
          %p242 = pneg %p85
        $region46: #{tpu_custom_call.1} parent=43 // pred_check_branch
          %244 = sbr.rel (%p242) target = $region48
        $region47: #{tpu_custom_call.1} parent=43 // pred_region
          %245 = dma.done [#allocation3], 4096
        $region48: #{tpu_custom_call.1} parent=43 // pred_fallthru
          _
        // Predicated region
        $region49: #{tpu_custom_call.1} parent=43 // pred_check
          %p246 = pneg %p127
        $region50: #{tpu_custom_call.1} parent=43 // pred_check_branch
          %248 = sbr.rel (%p246) target = $region52
        $region51: #{tpu_custom_call.1} parent=43 // pred_region
          %249 = dma.done [#allocation6], 2048
        $region52: #{tpu_custom_call.1} parent=43 // pred_fallthru
          _
        %p250 = scmp.lt.s32.totalorder %s22, 1
        %s251 = scalar_select %p250, %s22, 1
        %s252 = smul.addr %s251, 8
        %s253 = scalar_lea.vmem %s0, %s252
        %p254 = pneg %p43
        %p255 = pneg %p40
        %p256 = pneg %p64
        %p257 = pneg %p61
        %p258 = pneg %p85
        %p259 = pneg %p82
        %p260 = pneg %p106
        %p261 = pneg %p103
        %p262 = pneg %p127
        %p263 = pneg %p124
        %p264 = pneg %p148
        %p265 = pneg %p145
        %p266 = pneg %p174
        %p267 = pneg %p171
        %s268 = sand.u32 %s161, 1
        %s269 = scalar_lea.sflag [#allocation4], %s268
        %s270 = sand.u32 %s161, 1
        %s271 = smul.addr %s270, 8
        %s272 = scalar_lea.vmem [#allocation7], %s271
        %p273 = scmp.lt.s32.totalorder %s22, 1
        %s274 = scalar_select %p273, %s22, 1
        %s275 = smul.addr %s274, 8
        %s276 = scalar_lea.vmem %s0, %s275
        %v277 = vld [vmem:[%s276] sm:$0xff]
        %v278 = vmul.f32 %v277, %v277
        %vm279 = vcmask 31744
        %v280 = vsel %vm279, %v278, 0.0
        %281 = vadd.xlane.f32.xlu0 %v280
        %v282 = vpop.xlane.xlu0 %281
        %v283 = vmax.f32 %v282, 1e-15
        %v284 = vrsqrt.pop %v283
        %v285 = vmul.f32 %v282, %v284
        %v286 = vld [vmem:[%s1] sm:$0xf]
        %v288 = vsel %vm279, %v277, 0
        %vm290 = vcmask 1043456
        %v292 = vsel %vm290, %v286, 0
        %294 = vmatprep.subr.mxu0 0.0
        %295 = vmatpush1.msra.mxu0 %v292
        %296 = vmatprep.subr.mxu0 0.0
        %297 = vmatpush1.msra.mxu0 0.0
        %298 = vmatprep.subr.mxu0 0.0
        %299 = vmatpush1.msra.mxu0 0.0
        %300 = vmatprep.subr.mxu0 0.0
        %301 = vmatpush1.msra.mxu0 0.0
        %302 = vmatprep.subr.mxu0 0.0
        %303 = vmatpush1.msra.mxu0 0.0
        %304 = vmatprep.subr.mxu0 0.0
        %305 = vmatpush1.msra.mxu0 0.0
        %306 = vmatprep.subr.mxu0 0.0
        %307 = vmatpush1.msra.mxu0 0.0
        %308 = vmatprep.subr.mxu0 0.0
        %309 = vmatpush1.msra.mxu0 0.0
        %310 = vmatprep.subr.mxu0 0.0
        %311 = vmatpush1.msra.mxu0 0.0
        %312 = vmatprep.subr.mxu0 0.0
        %313 = vmatpush1.msra.mxu0 0.0
        %314 = vmatprep.subr.mxu0 0.0
        %315 = vmatpush1.msra.mxu0 0.0
        %316 = vmatprep.subr.mxu0 0.0
        %317 = vmatpush1.msra.mxu0 0.0
        %318 = vmatprep.subr.mxu0 0.0
        %319 = vmatpush1.msra.mxu0 0.0
        %320 = vmatprep.subr.mxu0 0.0
        %321 = vmatpush1.msra.mxu0 0.0
        %322 = vmatprep.subr.mxu0 0.0
        %323 = vmatpush1.msra.mxu0 0.0
        %324 = vmatprep.subr.mxu0 0.0
        %325 = vmatpush1.msra.mxu0 0.0
        %326 = vmatprep.subr.mxu0 0.0
        %327 = vmatpush1.msra.mxu0 0.0
        %328 = vmatprep.subr.mxu0 0.0
        %329 = vmatpush1.msra.mxu0 0.0
        %330 = vmatprep.subr.mxu0 0.0
        %331 = vmatpush1.msra.mxu0 0.0
        %332 = vmatprep.subr.mxu0 0.0
        %333 = vmatpush1.msra.mxu0 0.0
        %334 = vmatprep.subr.mxu0 0.0
        %335 = vmatpush1.msra.mxu0 0.0
        %336 = vmatprep.subr.mxu0 0.0
        %337 = vmatpush1.msra.mxu0 0.0
        %338 = vmatprep.subr.mxu0 0.0
        %339 = vmatpush1.msra.mxu0 0.0
        %340 = vmatprep.subr.mxu0 0.0
        %341 = vmatpush1.msra.mxu0 0.0
        %342 = vmatprep.subr.mxu0 0.0
        %343 = vmatpush1.msra.mxu0 0.0
        %344 = vmatprep.subr.mxu0 0.0
        %345 = vmatpush1.msra.mxu0 0.0
        %346 = vmatprep.subr.mxu0 0.0
        %347 = vmatpush1.msra.mxu0 0.0
        %348 = vmatprep.subr.mxu0 0.0
        %349 = vmatpush1.msra.mxu0 0.0
        %350 = vmatprep.subr.mxu0 0.0
        %351 = vmatpush1.msra.mxu0 0.0
        %352 = vmatprep.subr.mxu0 0.0
        %353 = vmatpush1.msra.mxu0 0.0
        %354 = vmatprep.subr.mxu0 0.0
        %355 = vmatpush1.msra.mxu0 0.0
        %356 = vmatprep.subr.mxu0 0.0
        %357 = vmatpush1.msra.mxu0 0.0
        %358 = vmatprep.mubr.f32.mxu0 0.0
        %359 = vmatmul.mubr.f32.gmra.mrb[0].mxu0 %v288
        %v360 = vpop.f32.mrb[0].mxu0
        %v361 = vadd.f32 0.0, %v360
        %v362 = vpop.f32.mrb[0].mxu0
        %363 = vdwg.mxu0
        %v364 = vmul.f32 %v361, %v361
        %365 = vadd.xlane.f32.xlu0 %v364
        %v366 = vpop.xlane.xlu0 %365
        %v367 = vmax.f32 %v366, 1e-15
        %v368 = vrsqrt.pop %v367
        %v369 = vmul.f32 %v366, %v368
        %v370 = vmin.f32 %v285, 0.9999999
        %v371 = vadd.f32 %v370, 1.0
        %v372 = vlog2.pop %v371
        %v373 = vmul.f32 %v372, 0.6931472
        %v374 = vsub.f32 1.0, %v370
        %v375 = vlog2.pop %v374
        %v376 = vmul.f32 %v375, 0.6931472
        %v377 = vsub.f32 %v373, %v376
        %v378 = vmul.f32 %v377, 0.5
        %v379 = vmul.f32 %v369, %v284
        %v380 = vmul.f32 %v379, %v378
        %v381 = vtanh.pop %v380
        %v382 = vmul.f32 %v361, %v368
        %v383 = vmul.f32 %v381, %v382
        %vm384 = vcmp.eq.f32.partialorder %v366, 0.0
        %v385 = vsel %vm384, 1, 0
        %vm386 = vcmp.eq.s32.totalorder %v385, 1
        %v387 = vsel %vm386, 0.0, %v383
        %v388 = vmax.f32 %v387, 0.0
        %v389 = vld [vmem:[#allocation2] sm:$0xff]
        %v390 = vld [vmem:[#allocation2 + $0x8] sm:$0xff]
        %v391 = vld [vmem:[#allocation2 + $0x10] sm:$0xff]
        %v392 = vld [vmem:[#allocation2 + $0x18] sm:$0xff]
        %v393 = vld [vmem:[#allocation2 + $0x20] sm:$0xff]
        %v394 = vld [vmem:[#allocation2 + $0x28] sm:$0xff]
        %v395 = vld [vmem:[#allocation2 + $0x30] sm:$0xff]
        %v396 = vld [vmem:[#allocation2 + $0x38] sm:$0xff]
        %v397 = vld [vmem:[#allocation2 + $0x40] sm:$0xff]
        %v398 = vld [vmem:[#allocation2 + $0x48] sm:$0xff]
        %v399 = vld [vmem:[#allocation2 + $0x50] sm:$0xff]
        %v400 = vld [vmem:[#allocation2 + $0x58] sm:$0xff]
        %v401 = vld [vmem:[#allocation2 + $0x60] sm:$0xff]
        %v402 = vld [vmem:[#allocation2 + $0x68] sm:$0xff]
        %v403 = vld [vmem:[#allocation2 + $0x70] sm:$0xff]
        %v404 = vld [vmem:[#allocation2 + $0x78] sm:$0xff]
        %v405 = vld [vmem:[%s3] sm:$0x1]
        %v407 = vlaneseq
        %v408 = vshrl.u32 %v407, 7
        %v409 = vsub.s32 0, %v408
        %v410 = vrot.slane %v405, %v409
        %412 = vmatprep.subr.mxu0 0.0
        %413 = vmatpush1.msra.mxu0 %v389
        %414 = vmatprep.subr.mxu0 0.0
        %415 = vmatpush1.msra.mxu0 %v390
        %416 = vmatprep.subr.mxu0 0.0
        %417 = vmatpush1.msra.mxu0 %v391
        %418 = vmatprep.subr.mxu0 0.0
        %419 = vmatpush1.msra.mxu0 %v392
        %420 = vmatprep.subr.mxu0 0.0
        %421 = vmatpush1.msra.mxu0 %v393
        %422 = vmatprep.subr.mxu0 0.0
        %423 = vmatpush1.msra.mxu0 %v394
        %424 = vmatprep.subr.mxu0 0.0
        %425 = vmatpush1.msra.mxu0 %v395
        %426 = vmatprep.subr.mxu0 0.0
        %427 = vmatpush1.msra.mxu0 %v396
        %428 = vmatprep.subr.mxu0 0.0
        %429 = vmatpush1.msra.mxu0 %v397
        %430 = vmatprep.subr.mxu0 0.0
        %431 = vmatpush1.msra.mxu0 %v398
        %432 = vmatprep.subr.mxu0 0.0
        %433 = vmatpush1.msra.mxu0 %v399
        %434 = vmatprep.subr.mxu0 0.0
        %435 = vmatpush1.msra.mxu0 %v400
        %436 = vmatprep.subr.mxu0 0.0
        %437 = vmatpush1.msra.mxu0 %v401
        %438 = vmatprep.subr.mxu0 0.0
        %439 = vmatpush1.msra.mxu0 %v402
        %440 = vmatprep.subr.mxu0 0.0
        %441 = vmatpush1.msra.mxu0 %v403
        %442 = vmatprep.subr.mxu0 0.0
        %443 = vmatpush1.msra.mxu0 %v404
        %444 = vmatprep.subr.mxu0 0.0
        %445 = vmatpush1.msra.mxu0 0.0
        %446 = vmatprep.subr.mxu0 0.0
        %447 = vmatpush1.msra.mxu0 0.0
        %448 = vmatprep.subr.mxu0 0.0
        %449 = vmatpush1.msra.mxu0 0.0
        %450 = vmatprep.subr.mxu0 0.0
        %451 = vmatpush1.msra.mxu0 0.0
        %452 = vmatprep.subr.mxu0 0.0
        %453 = vmatpush1.msra.mxu0 0.0
        %454 = vmatprep.subr.mxu0 0.0
        %455 = vmatpush1.msra.mxu0 0.0
        %456 = vmatprep.subr.mxu0 0.0
        %457 = vmatpush1.msra.mxu0 0.0
        %458 = vmatprep.subr.mxu0 0.0
        %459 = vmatpush1.msra.mxu0 0.0
        %460 = vmatprep.subr.mxu0 0.0
        %461 = vmatpush1.msra.mxu0 0.0
        %462 = vmatprep.subr.mxu0 0.0
        %463 = vmatpush1.msra.mxu0 0.0
        %464 = vmatprep.subr.mxu0 0.0
        %465 = vmatpush1.msra.mxu0 0.0
        %466 = vmatprep.subr.mxu0 0.0
        %467 = vmatpush1.msra.mxu0 0.0
        %468 = vmatprep.subr.mxu0 0.0
        %469 = vmatpush1.msra.mxu0 0.0
        %470 = vmatprep.subr.mxu0 0.0
        %471 = vmatpush1.msra.mxu0 0.0
        %472 = vmatprep.subr.mxu0 0.0
        %473 = vmatpush1.msra.mxu0 0.0
        %474 = vmatprep.subr.mxu0 0.0
        %475 = vmatpush1.msra.mxu0 0.0
        %476 = vmatprep.mubr.f32.mxu0 0.0
        %477 = vmatmul.mubr.f32.gmra.mrb[0].mxu0 %v388
        %v478 = vpop.f32.mrb[0].mxu0
        %v479 = vadd.f32 %v410, %v478
        %v480 = vpop.f32.mrb[0].mxu0
        %481 = vdwg.mxu0
        %v482 = vmax.f32 %v479, 0.0
        %s483 = scalar_lea.vmem [#allocation2], 128
        %v484 = vld [vmem:[%s483] sm:$0xff]
        %v485 = vld [vmem:[%s483 + $0x8] sm:$0xff]
        %v486 = vld [vmem:[%s483 + $0x10] sm:$0xff]
        %v487 = vld [vmem:[%s483 + $0x18] sm:$0xff]
        %v488 = vld [vmem:[%s483 + $0x20] sm:$0xff]
        %v489 = vld [vmem:[%s483 + $0x28] sm:$0xff]
        %v490 = vld [vmem:[%s483 + $0x30] sm:$0xff]
        %v491 = vld [vmem:[%s483 + $0x38] sm:$0xff]
        %v492 = vld [vmem:[%s483 + $0x40] sm:$0xff]
        %v493 = vld [vmem:[%s483 + $0x48] sm:$0xff]
        %v494 = vld [vmem:[%s483 + $0x50] sm:$0xff]
        %v495 = vld [vmem:[%s483 + $0x58] sm:$0xff]
        %v496 = vld [vmem:[%s483 + $0x60] sm:$0xff]
        %v497 = vld [vmem:[%s483 + $0x68] sm:$0xff]
        %v498 = vld [vmem:[%s483 + $0x70] sm:$0xff]
        %v499 = vld [vmem:[%s483 + $0x78] sm:$0xff]
        %s500 = scalar_lea.vmem %s3, 1
        %v501 = vld [vmem:[%s500] sm:$0x1]
        %v503 = vlaneseq
        %v504 = vshrl.u32 %v503, 7
        %v505 = vsub.s32 0, %v504
        %v506 = vrot.slane %v501, %v505
        %508 = vmatprep.subr.mxu0 0.0
        %509 = vmatpush1.msra.mxu0 %v484
        %510 = vmatprep.subr.mxu0 0.0
        %511 = vmatpush1.msra.mxu0 %v485
        %512 = vmatprep.subr.mxu0 0.0
        %513 = vmatpush1.msra.mxu0 %v486
        %514 = vmatprep.subr.mxu0 0.0
        %515 = vmatpush1.msra.mxu0 %v487
        %516 = vmatprep.subr.mxu0 0.0
        %517 = vmatpush1.msra.mxu0 %v488
        %518 = vmatprep.subr.mxu0 0.0
        %519 = vmatpush1.msra.mxu0 %v489
        %520 = vmatprep.subr.mxu0 0.0
        %521 = vmatpush1.msra.mxu0 %v490
        %522 = vmatprep.subr.mxu0 0.0
        %523 = vmatpush1.msra.mxu0 %v491
        %524 = vmatprep.subr.mxu0 0.0
        %525 = vmatpush1.msra.mxu0 %v492
        %526 = vmatprep.subr.mxu0 0.0
        %527 = vmatpush1.msra.mxu0 %v493
        %528 = vmatprep.subr.mxu0 0.0
        %529 = vmatpush1.msra.mxu0 %v494
        %530 = vmatprep.subr.mxu0 0.0
        %531 = vmatpush1.msra.mxu0 %v495
        %532 = vmatprep.subr.mxu0 0.0
        %533 = vmatpush1.msra.mxu0 %v496
        %534 = vmatprep.subr.mxu0 0.0
        %535 = vmatpush1.msra.mxu0 %v497
        %536 = vmatprep.subr.mxu0 0.0
        %537 = vmatpush1.msra.mxu0 %v498
        %538 = vmatprep.subr.mxu0 0.0
        %539 = vmatpush1.msra.mxu0 %v499
        %540 = vmatprep.subr.mxu0 0.0
        %541 = vmatpush1.msra.mxu0 0.0
        %542 = vmatprep.subr.mxu0 0.0
        %543 = vmatpush1.msra.mxu0 0.0
        %544 = vmatprep.subr.mxu0 0.0
        %545 = vmatpush1.msra.mxu0 0.0
        %546 = vmatprep.subr.mxu0 0.0
        %547 = vmatpush1.msra.mxu0 0.0
        %548 = vmatprep.subr.mxu0 0.0
        %549 = vmatpush1.msra.mxu0 0.0
        %550 = vmatprep.subr.mxu0 0.0
        %551 = vmatpush1.msra.mxu0 0.0
        %552 = vmatprep.subr.mxu0 0.0
        %553 = vmatpush1.msra.mxu0 0.0
        %554 = vmatprep.subr.mxu0 0.0
        %555 = vmatpush1.msra.mxu0 0.0
        %556 = vmatprep.subr.mxu0 0.0
        %557 = vmatpush1.msra.mxu0 0.0
        %558 = vmatprep.subr.mxu0 0.0
        %559 = vmatpush1.msra.mxu0 0.0
        %560 = vmatprep.subr.mxu0 0.0
        %561 = vmatpush1.msra.mxu0 0.0
        %562 = vmatprep.subr.mxu0 0.0
        %563 = vmatpush1.msra.mxu0 0.0
        %564 = vmatprep.subr.mxu0 0.0
        %565 = vmatpush1.msra.mxu0 0.0
        %566 = vmatprep.subr.mxu0 0.0
        %567 = vmatpush1.msra.mxu0 0.0
        %568 = vmatprep.subr.mxu0 0.0
        %569 = vmatpush1.msra.mxu0 0.0
        %570 = vmatprep.subr.mxu0 0.0
        %571 = vmatpush1.msra.mxu0 0.0
        %572 = vmatprep.mubr.f32.mxu0 0.0
        %573 = vmatmul.mubr.f32.gmra.mrb[0].mxu0 %v482
        %v574 = vpop.f32.mrb[0].mxu0
        %v575 = vadd.f32 %v506, %v574
        %v576 = vpop.f32.mrb[0].mxu0
        %577 = vdwg.mxu0
        %v578 = vmax.f32 %v575, 0.0
        %v579 = vld [vmem:[#allocation5] sm:$0xff]
        %v580 = vld [vmem:[#allocation5 + $0x8] sm:$0xff]
        %v581 = vld [vmem:[#allocation5 + $0x10] sm:$0xff]
        %v582 = vld [vmem:[#allocation5 + $0x18] sm:$0xff]
        %v583 = vld [vmem:[#allocation5 + $0x20] sm:$0xff]
        %v584 = vld [vmem:[#allocation5 + $0x28] sm:$0xff]
        %v585 = vld [vmem:[#allocation5 + $0x30] sm:$0xff]
        %v586 = vld [vmem:[#allocation5 + $0x38] sm:$0xff]
        %v587 = vld [vmem:[#allocation5 + $0x40] sm:$0xff]
        %v588 = vld [vmem:[#allocation5 + $0x48] sm:$0xff]
        %v589 = vld [vmem:[#allocation5 + $0x50] sm:$0xff]
        %v590 = vld [vmem:[#allocation5 + $0x58] sm:$0xff]
        %v591 = vld [vmem:[#allocation5 + $0x60] sm:$0xff]
        %v592 = vld [vmem:[#allocation5 + $0x68] sm:$0xff]
        %v593 = vld [vmem:[#allocation5 + $0x70] sm:$0xff]
        %v594 = vld [vmem:[#allocation5 + $0x78] sm:$0xff]
        %v595 = vld [vmem:[%s5] sm:$0x1]
        %v597 = vlaneseq
        %v598 = vshrl.u32 %v597, 7
        %v599 = vsub.s32 0, %v598
        %v600 = vrot.slane %v595, %v599
        %602 = vmatprep.subr.mxu0 0.0
        %603 = vmatpush1.msra.mxu0 %v579
        %604 = vmatprep.subr.mxu0 0.0
        %605 = vmatpush1.msra.mxu0 %v580
        %606 = vmatprep.subr.mxu0 0.0
        %607 = vmatpush1.msra.mxu0 %v581
        %608 = vmatprep.subr.mxu0 0.0
        %609 = vmatpush1.msra.mxu0 %v582
        %610 = vmatprep.subr.mxu0 0.0
        %611 = vmatpush1.msra.mxu0 %v583
        %612 = vmatprep.subr.mxu0 0.0
        %613 = vmatpush1.msra.mxu0 %v584
        %614 = vmatprep.subr.mxu0 0.0
        %615 = vmatpush1.msra.mxu0 %v585
        %616 = vmatprep.subr.mxu0 0.0
        %617 = vmatpush1.msra.mxu0 %v586
        %618 = vmatprep.subr.mxu0 0.0
        %619 = vmatpush1.msra.mxu0 %v587
        %620 = vmatprep.subr.mxu0 0.0
        %621 = vmatpush1.msra.mxu0 %v588
        %622 = vmatprep.subr.mxu0 0.0
        %623 = vmatpush1.msra.mxu0 %v589
        %624 = vmatprep.subr.mxu0 0.0
        %625 = vmatpush1.msra.mxu0 %v590
        %626 = vmatprep.subr.mxu0 0.0
        %627 = vmatpush1.msra.mxu0 %v591
        %628 = vmatprep.subr.mxu0 0.0
        %629 = vmatpush1.msra.mxu0 %v592
        %630 = vmatprep.subr.mxu0 0.0
        %631 = vmatpush1.msra.mxu0 %v593
        %632 = vmatprep.subr.mxu0 0.0
        %633 = vmatpush1.msra.mxu0 %v594
        %634 = vmatprep.subr.mxu0 0.0
        %635 = vmatpush1.msra.mxu0 0.0
        %636 = vmatprep.subr.mxu0 0.0
        %637 = vmatpush1.msra.mxu0 0.0
        %638 = vmatprep.subr.mxu0 0.0
        %639 = vmatpush1.msra.mxu0 0.0
        %640 = vmatprep.subr.mxu0 0.0
        %641 = vmatpush1.msra.mxu0 0.0
        %642 = vmatprep.subr.mxu0 0.0
        %643 = vmatpush1.msra.mxu0 0.0
        %644 = vmatprep.subr.mxu0 0.0
        %645 = vmatpush1.msra.mxu0 0.0
        %646 = vmatprep.subr.mxu0 0.0
        %647 = vmatpush1.msra.mxu0 0.0
        %648 = vmatprep.subr.mxu0 0.0
        %649 = vmatpush1.msra.mxu0 0.0
        %650 = vmatprep.subr.mxu0 0.0
        %651 = vmatpush1.msra.mxu0 0.0
        %652 = vmatprep.subr.mxu0 0.0
        %653 = vmatpush1.msra.mxu0 0.0
        %654 = vmatprep.subr.mxu0 0.0
        %655 = vmatpush1.msra.mxu0 0.0
        %656 = vmatprep.subr.mxu0 0.0
        %657 = vmatpush1.msra.mxu0 0.0
        %658 = vmatprep.subr.mxu0 0.0
        %659 = vmatpush1.msra.mxu0 0.0
        %660 = vmatprep.subr.mxu0 0.0
        %661 = vmatpush1.msra.mxu0 0.0
        %662 = vmatprep.subr.mxu0 0.0
        %663 = vmatpush1.msra.mxu0 0.0
        %664 = vmatprep.subr.mxu0 0.0
        %665 = vmatpush1.msra.mxu0 0.0
        %666 = vmatprep.mubr.f32.mxu0 0.0
        %667 = vmatmul.mubr.f32.gmra.mrb[0].mxu0 %v578
        %v668 = vpop.f32.mrb[0].mxu0
        %v669 = vadd.f32 %v600, %v668
        %v670 = vpop.f32.mrb[0].mxu0
        %671 = vdwg.mxu0
        %672 = vst [vmem:[%s272] sm:$0xff] %v669
        %s673 = sand.u32 %s161, 1
        %s674 = scalar_lea.sflag [#allocation4], %s673
        %s675 = sand.u32 %s161, 1
        %s676 = smul.addr %s675, 8
        %s677 = scalar_lea.vmem [#allocation7], %s676
        // Predicated region
        $region53: #{tpu_custom_call.1} parent=43 // pred_check
          %p678 = pneg %p171
        $region54: #{tpu_custom_call.1} parent=43 // pred_check_branch
          %680 = sbr.rel (%p678) target = $region56
        $region55: #{tpu_custom_call.1} parent=43 // pred_region
          %s682 = ssub.s32 128, 128
          %683 = vsyncadd %s674, %s682
          %s684 = smul.addr %s22, 128
          %s685 = scalar_lea.hbm %s6, %s684
          %s687 = sshll.u32 %s677, 4
          %s688 = int_to_ptr.vmem [resolvable:$true] %s687
          %690 = dma.vmem_to_hbm [thread:$0]  %s688, 128, %s685, %s674
        $region56: #{tpu_custom_call.1} parent=43 // pred_fallthru
          _
      $region44: #{tpu_custom_call.1} parent=5 // pred_fallthru
        _
      %p691 = scmp.le.s32.totalorder 2, %s17
      // Predicated region
      $region57: #{tpu_custom_call.1} parent=5 // pred_check
        %p692 = pneg %p691
      $region58: #{tpu_custom_call.1} parent=5 // pred_check_branch
        %694 = sbr.rel (%p692) target = $region60
      $region59: #{tpu_custom_call.1} parent=5 // pred_region
        %s695 = ssub.s32 %s17, 2
        // Predicated region
        $region61: #{tpu_custom_call.1} parent=59 // pred_check
          %p696 = pneg %p177
        $region62: #{tpu_custom_call.1} parent=59 // pred_check_branch
          %698 = sbr.rel (%p696) target = $region64
        $region63: #{tpu_custom_call.1} parent=59 // pred_region
          %s699 = sand.u32 %s162, 1
          %s700 = scalar_lea.sflag [#allocation4], %s699
          %s701 = sand.u32 %s162, 1
          %s702 = smul.addr %s701, 8
          %s703 = scalar_lea.vmem [#allocation7], %s702
          %704 = dma.done %s700, 128
        $region64: #{tpu_custom_call.1} parent=59 // pred_fallthru
          _
      $region60: #{tpu_custom_call.1} parent=5 // pred_fallthru
        _
    $region6: #{tpu_custom_call.1} parent=1 // loop_footer
      %s21 = sadd.s32 1, %s17
    $region7: #{tpu_custom_call.1} parent=1 // loop_footer_branch
      %16 = sbr.rel target = $region3
    $region8: #{tpu_custom_call.1} parent=1 // loop_exit
      _
    %705 = vsyncpa [#allocation3], 1
    %s706 = scalar_lea.sflag [#allocation3], 1
    %707 = vsyncpa %s706, 1
    %708 = vsyncpa [#allocation6], 1
    %709 = vsyncpa [#allocation4], 1
    %s710 = scalar_lea.sflag [#allocation4], 1
    %711 = vsyncpa %s710, 1

// kernel: tpu_custom_call.1
$region0: #{tpu_custom_call.1}
  #allocation0 [shape = 'u32[]', space=smem, size = 0x4, offset = 0x4, fixed_abs, tag = 'smem constant byte address 0x4 - core index']
  #allocation1 [shape = 'u32[144,128]{1,0:T(1,128)}', space=vmem, size = 0x12000, scoped, tag = 'internal scratch']
  %s0 = inlined_call_operand.vmem [shape: f32[16,4], index: 0, kind: input, shape index: {}]
  %s1 = inlined_call_operand.vmem [shape: f32[4,128], index: 1, kind: input, shape index: {}]
  %s2 = inlined_call_operand.hbm [shape: f32[2,128,128], index: 2, kind: input, shape index: {}]
  %s3 = inlined_call_operand.vmem [shape: f32[2,1,128], index: 3, kind: input, shape index: {}]
  %s4 = inlined_call_operand.hbm [shape: f32[128,128], index: 4, kind: input, shape index: {}]
  %s5 = inlined_call_operand.vmem [shape: f32[1,128], index: 5, kind: input, shape index: {}]
  %s6 = inlined_call_operand.hbm [shape: f32[16,128], index: 6, kind: output, shape index: {}]
  %s7 = sld [smem:[#allocation0]]
  $region65: #{tpu_custom_call.1} parent=0
    _
  %s9 = ssub.s32 1, %s7
  %s10 = scalar_select 0, %s9, %s7
  $region1: #{tpu_custom_call.1} parent=0
    #allocation2 [shape = 'u8[131072]{0}', space=vmem, size = 0x20000, scoped, tag = 'input window, operand 2, single buffered']
    #allocation3 [shape = 's32[2]{0}', space=sflag, size = 0x8, scoped, tag = 'scoped memory for tpu_custom_call.1']
    #allocation4 [shape = 's32[2]{0}', space=sflag, size = 0x8, scoped, tag = 'scoped memory for tpu_custom_call.1']
    #allocation5 [shape = 'u8[65536]{0}', space=vmem, size = 0x10000, scoped, tag = 'input window, operand 4, single buffered']
    #allocation6 [shape = 's32[1]{0}', space=sflag, size = 0x4, scoped, tag = 'scoped memory for tpu_custom_call.1']
    #allocation7 [shape = 'u8[8192]{0}', space=vmem, size = 0x2000, scoped, tag = 'output window, operand 0']
    %11 = vsyncpa [#allocation3], 0
    %12 = vsyncpa [#allocation6], 0
    %13 = vsyncpa [#allocation4], 0
    %s14 = scalar_lea.sflag [#allocation4], 1
    %15 = vsyncpa %s14, 0
    loop: start=0, step=1, limit=4
    $region2: #{tpu_custom_call.1} parent=1 // loop_pre_header
      _
    $region3: #{tpu_custom_call.1} parent=1 // loop_header
      %s17 = sphi 0, %s21
      %p18 = scmp.ge.s32.totalorder %s17, 4
      %s27 = sphi 0, %s29
      %s30 = sphi 0, %s27
      %s31 = sphi 0, %s30
      %s47 = sphi 0, %s31
      %s51 = sphi 0, %s51
      %s53 = sphi 0, %s51
      %s54 = sphi 0, %s53
      %s68 = sphi 0, %s54
      %s72 = sphi 0, %s72
      %s74 = sphi 0, %s72
      %s75 = sphi 0, %s74
      %s89 = sphi 0, %s75
      %s93 = sphi 0, %s93
      %s95 = sphi 0, %s93
      %s96 = sphi 0, %s95
      %s110 = sphi 0, %s96
      %s114 = sphi 0, %s114
      %s116 = sphi 0, %s114
      %s117 = sphi 0, %s116
      %s131 = sphi 0, %s117
      %s135 = sphi 0, %s135
      %s137 = sphi 0, %s135
      %s138 = sphi 0, %s137
      %s152 = sphi 0, %s138
      %s158 = sphi 0, %s160
      %s161 = sphi 0, %s158
      %s162 = sphi 0, %s161
      %s178 = sphi 0, %s162
    $region4: #{tpu_custom_call.1} parent=1 // loop_header_branch
      %20 = sbr.rel (%p18) target = $region8
    $region5: #{tpu_custom_call.1} parent=1 // loop_body
      %s22 = ssub.s32 %s17, 1
      %s23 = ssub.s32 %s17, 2
      %s24 = sadd.s32 %s17, 1
      %s25 = ssub.s32 %s17, %s24
      %p26 = scmp.eq.s32.totalorder %s25, 0
      %s28 = sadd.s32 %s27, 1
      %s29 = scalar_select %p26, %s27, %s28
      %p32 = pneg %p26
      %p33 = scmp.eq.s32.totalorder %s17, 1
      %p34 = por %p32, %p33
      %p35 = scmp.ne.s32.totalorder %s27, %s30
      %p36 = scmp.eq.s32.totalorder %s17, 0
      %p37 = por %p35, %p36
      %p38 = scmp.ne.s32.totalorder %s27, %s30
      %p39 = scmp.eq.s32.totalorder %s22, 1
      %p40 = por %p38, %p39
      %p41 = scmp.ne.s32.totalorder %s30, %s31
      %p42 = scmp.eq.s32.totalorder %s22, 0
      %p43 = por %p41, %p42
      %p44 = scmp.ne.s32.totalorder %s30, %s31
      %p45 = scmp.eq.s32.totalorder %s23, 1
      %p46 = por %p44, %p45
      %p48 = scmp.ne.s32.totalorder %s31, %s47
      %p49 = scmp.eq.s32.totalorder %s23, 0
      %p50 = por %p48, %p49
      %s52 = sadd.s32 %s51, 1
      %p55 = scmp.eq.s32.totalorder %s17, 1
      %p56 = scmp.ne.s32.totalorder %s51, %s53
      %p57 = scmp.eq.s32.totalorder %s17, 0
      %p58 = por %p56, %p57
      %p59 = scmp.ne.s32.totalorder %s51, %s53
      %p60 = scmp.eq.s32.totalorder %s22, 1
      %p61 = por %p59, %p60
      %p62 = scmp.ne.s32.totalorder %s53, %s54
      %p63 = scmp.eq.s32.totalorder %s22, 0
      %p64 = por %p62, %p63
      %p65 = scmp.ne.s32.totalorder %s53, %s54
      %p66 = scmp.eq.s32.totalorder %s23, 1
      %p67 = por %p65, %p66
      %p69 = scmp.ne.s32.totalorder %s54, %s68
      %p70 = scmp.eq.s32.totalorder %s23, 0
      %p71 = por %p69, %p70
      %s73 = sadd.s32 %s72, 1
      %p76 = scmp.eq.s32.totalorder %s17, 1
      %p77 = scmp.ne.s32.totalorder %s72, %s74
      %p78 = scmp.eq.s32.totalorder %s17, 0
      %p79 = por %p77, %p78
      %p80 = scmp.ne.s32.totalorder %s72, %s74
      %p81 = scmp.eq.s32.totalorder %s22, 1
      %p82 = por %p80, %p81
      %p83 = scmp.ne.s32.totalorder %s74, %s75
      %p84 = scmp.eq.s32.totalorder %s22, 0
      %p85 = por %p83, %p84
      %p86 = scmp.ne.s32.totalorder %s74, %s75
      %p87 = scmp.eq.s32.totalorder %s23, 1
      %p88 = por %p86, %p87
      %p90 = scmp.ne.s32.totalorder %s75, %s89
      %p91 = scmp.eq.s32.totalorder %s23, 0
      %p92 = por %p90, %p91
      %s94 = sadd.s32 %s93, 1
      %p97 = scmp.eq.s32.totalorder %s17, 1
      %p98 = scmp.ne.s32.totalorder %s93, %s95
      %p99 = scmp.eq.s32.totalorder %s17, 0
      %p100 = por %p98, %p99
      %p101 = scmp.ne.s32.totalorder %s93, %s95
      %p102 = scmp.eq.s32.totalorder %s22, 1
      %p103 = por %p101, %p102
      %p104 = scmp.ne.s32.totalorder %s95, %s96
      %p105 = scmp.eq.s32.totalorder %s22, 0
      %p106 = por %p104, %p105
      %p107 = scmp.ne.s32.totalorder %s95, %s96
      %p108 = scmp.eq.s32.totalorder %s23, 1
      %p109 = por %p107, %p108
      %p111 = scmp.ne.s32.totalorder %s96, %s110
      %p112 = scmp.eq.s32.totalorder %s23, 0
      %p113 = por %p111, %p112
      %s115 = sadd.s32 %s114, 1
      %p118 = scmp.eq.s32.totalorder %s17, 1
      %p119 = scmp.ne.s32.totalorder %s114, %s116
      %p120 = scmp.eq.s32.totalorder %s17, 0
      %p121 = por %p119, %p120
      %p122 = scmp.ne.s32.totalorder %s114, %s116
      %p123 = scmp.eq.s32.totalorder %s22, 1
      %p124 = por %p122, %p123
      %p125 = scmp.ne.s32.totalorder %s116, %s117
      %p126 = scmp.eq.s32.totalorder %s22, 0
      %p127 = por %p125, %p126
      %p128 = scmp.ne.s32.totalorder %s116, %s117
      %p129 = scmp.eq.s32.totalorder %s23, 1
      %p130 = por %p128, %p129
      %p132 = scmp.ne.s32.totalorder %s117, %s131
      %p133 = scmp.eq.s32.totalorder %s23, 0
      %p134 = por %p132, %p133
      %s136 = sadd.s32 %s135, 1
      %p139 = scmp.eq.s32.totalorder %s17, 1
      %p140 = scmp.ne.s32.totalorder %s135, %s137
      %p141 = scmp.eq.s32.totalorder %s17, 0
      %p142 = por %p140, %p141
      %p143 = scmp.ne.s32.totalorder %s135, %s137
      %p144 = scmp.eq.s32.totalorder %s22, 1
      %p145 = por %p143, %p144
      %p146 = scmp.ne.s32.totalorder %s137, %s138
      %p147 = scmp.eq.s32.totalorder %s22, 0
      %p148 = por %p146, %p147
      %p149 = scmp.ne.s32.totalorder %s137, %s138
      %p150 = scmp.eq.s32.totalorder %s23, 1
      %p151 = por %p149, %p150
      %p153 = scmp.ne.s32.totalorder %s138, %s152
      %p154 = scmp.eq.s32.totalorder %s23, 0
      %p155 = por %p153, %p154
      %s156 = ssub.s32 %s17, %s24
      %p157 = scmp.eq.s32.totalorder %s156, 0
      %s159 = sadd.s32 %s158, 1
      %s160 = scalar_select %p157, %s158, %s159
      %p163 = pneg %p157
      %p164 = scmp.eq.s32.totalorder %s17, 1
      %p165 = por %p163, %p164
      %p166 = scmp.ne.s32.totalorder %s158, %s161
      %p167 = scmp.eq.s32.totalorder %s17, 0
      %p168 = por %p166, %p167
      %p169 = scmp.ne.s32.totalorder %s158, %s161
      %p170 = scmp.eq.s32.totalorder %s22, 1
      %p171 = por %p169, %p170
      %p172 = scmp.ne.s32.totalorder %s161, %s162
      %p173 = scmp.eq.s32.totalorder %s22, 0
      %p174 = por %p172, %p173
      %p175 = scmp.ne.s32.totalorder %s161, %s162
      %p176 = scmp.eq.s32.totalorder %s23, 1
      %p177 = por %p175, %p176
      %p179 = scmp.ne.s32.totalorder %s162, %s178
      %p180 = scmp.eq.s32.totalorder %s23, 0
      %p181 = por %p179, %p180
      %p182 = scmp.le.s32.totalorder 1, %s17
      %p183 = scmp.lt.s32.totalorder %s17, 3
      %p184 = pnand %p182, %p183
      %p185 = pneg %p184
      // Predicated region
      $region9: #{tpu_custom_call.1} parent=5 // pred_check
        _
      $region10: #{tpu_custom_call.1} parent=5 // pred_check_branch
        %187 = sbr.rel (%p184) target = $region12
      $region11: #{tpu_custom_call.1} parent=5 // pred_region
        %s188 = ssub.s32 %s17, 1
        // Predicated region
        $region13: #{tpu_custom_call.1} parent=11 // pred_check
          %p189 = pneg %p64
        $region14: #{tpu_custom_call.1} parent=11 // pred_check_branch
          %191 = sbr.rel (%p189) target = $region16
        $region15: #{tpu_custom_call.1} parent=11 // pred_region
          _
        $region16: #{tpu_custom_call.1} parent=11 // pred_fallthru
          _
        // Predicated region
        $region17: #{tpu_custom_call.1} parent=11 // pred_check
          %p192 = pneg %p85
        $region18: #{tpu_custom_call.1} parent=11 // pred_check_branch
          %194 = sbr.rel (%p192) target = $region20
        $region19: #{tpu_custom_call.1} parent=11 // pred_region
          %s196 = ssub.s32 4096, 4096
          %197 = vsyncadd [#allocation3], %s196
          %s198 = sshll.u32 [#allocation2], 4
          %s199 = int_to_ptr.vmem [resolvable:$true] %s198
          %204 = dma.hbm_to_vmem [thread:$0]  %s2, 4096, %s199, [#allocation3], 128, 128, 8
        $region20: #{tpu_custom_call.1} parent=11 // pred_fallthru
          _
        // Predicated region
        $region21: #{tpu_custom_call.1} parent=11 // pred_check
          %p205 = pneg %p106
        $region22: #{tpu_custom_call.1} parent=11 // pred_check_branch
          %207 = sbr.rel (%p205) target = $region24
        $region23: #{tpu_custom_call.1} parent=11 // pred_region
          _
        $region24: #{tpu_custom_call.1} parent=11 // pred_fallthru
          _
        // Predicated region
        $region25: #{tpu_custom_call.1} parent=11 // pred_check
          %p208 = pneg %p127
        $region26: #{tpu_custom_call.1} parent=11 // pred_check_branch
          %210 = sbr.rel (%p208) target = $region28
        $region27: #{tpu_custom_call.1} parent=11 // pred_region
          %s212 = ssub.s32 2048, 2048
          %213 = vsyncadd [#allocation6], %s212
          %s214 = sshll.u32 [#allocation5], 4
          %s215 = int_to_ptr.vmem [resolvable:$true] %s214
          %220 = dma.hbm_to_vmem [thread:$0]  %s4, 2048, %s215, [#allocation6], 128, 128, 8
        $region28: #{tpu_custom_call.1} parent=11 // pred_fallthru
          _
        // Predicated region
        $region29: #{tpu_custom_call.1} parent=11 // pred_check
          %p221 = pneg %p148
        $region30: #{tpu_custom_call.1} parent=11 // pred_check_branch
          %223 = sbr.rel (%p221) target = $region32
        $region31: #{tpu_custom_call.1} parent=11 // pred_region
          _
        $region32: #{tpu_custom_call.1} parent=11 // pred_fallthru
          _
      $region12: #{tpu_custom_call.1} parent=5 // pred_fallthru
        _
      %p224 = scmp.lt.s32.totalorder %s17, 2
      // Predicated region
      $region33: #{tpu_custom_call.1} parent=5 // pred_check
        %p225 = pneg %p224
      $region34: #{tpu_custom_call.1} parent=5 // pred_check_branch
        %227 = sbr.rel (%p225) target = $region36
      $region35: #{tpu_custom_call.1} parent=5 // pred_region
        // Predicated region
        $region37: #{tpu_custom_call.1} parent=35 // pred_check
          %p228 = pneg %p37
        $region38: #{tpu_custom_call.1} parent=35 // pred_check_branch
          %230 = sbr.rel (%p228) target = $region40
        $region39: #{tpu_custom_call.1} parent=35 // pred_region
          %p231 = scmp.lt.s32.totalorder %s17, 1
          %s232 = scalar_select %p231, %s17, 1
          %s233 = smul.addr %s232, 8
          %s234 = scalar_lea.vmem %s0, %s233
        $region40: #{tpu_custom_call.1} parent=35 // pred_fallthru
          _
      $region36: #{tpu_custom_call.1} parent=5 // pred_fallthru
        _
      %p235 = scmp.le.s32.totalorder 1, %s17
      %p236 = scmp.lt.s32.totalorder %s17, 3
      %p237 = pnand %p235, %p236
      %p238 = pneg %p237
      // Predicated region
      $region41: #{tpu_custom_call.1} parent=5 // pred_check
        _
      $region42: #{tpu_custom_call.1} parent=5 // pred_check_branch
        %240 = sbr.rel (%p237) target = $region44
      $region43: #{tpu_custom_call.1} parent=5 // pred_region
        %s241 = ssub.s32 %s17, 1
        // Predicated region
        $region45: #{tpu_custom_call.1} parent=43 // pred_check
          %p242 = pneg %p85
        $region46: #{tpu_custom_call.1} parent=43 // pred_check_branch
          %244 = sbr.rel (%p242) target = $region48
        $region47: #{tpu_custom_call.1} parent=43 // pred_region
          %245 = dma.done [#allocation3], 4096
        $region48: #{tpu_custom_call.1} parent=43 // pred_fallthru
          _
        // Predicated region
        $region49: #{tpu_custom_call.1} parent=43 // pred_check
          %p246 = pneg %p127
        $region50: #{tpu_custom_call.1} parent=43 // pred_check_branch
          %248 = sbr.rel (%p246) target = $region52
        $region51: #{tpu_custom_call.1} parent=43 // pred_region
          %249 = dma.done [#allocation6], 2048
        $region52: #{tpu_custom_call.1} parent=43 // pred_fallthru
          _
        %p250 = scmp.lt.s32.totalorder %s22, 1
        %s251 = scalar_select %p250, %s22, 1
        %s252 = smul.addr %s251, 8
        %s253 = scalar_lea.vmem %s0, %s252
        %p254 = pneg %p43
        %p255 = pneg %p40
        %p256 = pneg %p64
        %p257 = pneg %p61
        %p258 = pneg %p85
        %p259 = pneg %p82
        %p260 = pneg %p106
        %p261 = pneg %p103
        %p262 = pneg %p127
        %p263 = pneg %p124
        %p264 = pneg %p148
        %p265 = pneg %p145
        %p266 = pneg %p174
        %p267 = pneg %p171
        %s268 = sand.u32 %s161, 1
        %s269 = scalar_lea.sflag [#allocation4], %s268
        %s270 = sand.u32 %s161, 1
        %s271 = smul.addr %s270, 8
        %s272 = scalar_lea.vmem [#allocation7], %s271
        %p273 = scmp.lt.s32.totalorder %s22, 1
        %s274 = scalar_select %p273, %s22, 1
        %s275 = smul.addr %s274, 8
        %s276 = scalar_lea.vmem %s0, %s275
        %v277 = vld [vmem:[%s276] sm:$0xff]
        %v278 = vmul.f32 %v277, %v277
        %vm279 = vcmask 31744
        %v280 = vsel %vm279, %v278, 0.0
        %281 = vadd.xlane.f32.xlu0 %v280
        %v282 = vpop.xlane.xlu0 %281
        %v283 = vmax.f32 %v282, 1e-15
        %v284 = vrsqrt.pop %v283
        %v285 = vmul.f32 %v282, %v284
        %v286 = vld [vmem:[%s1] sm:$0xf]
        %v288 = vsel %vm279, %v277, 0
        %vm290 = vcmask 1043456
        %v292 = vsel %vm290, %v286, 0
        %294 = vmatprep.subr.mxu0 0.0
        %295 = vmatpush1.msra.mxu0 %v292
        %296 = vmatprep.subr.mxu0 0.0
        %297 = vmatpush1.msra.mxu0 0.0
        %298 = vmatprep.subr.mxu0 0.0
        %299 = vmatpush1.msra.mxu0 0.0
        %300 = vmatprep.subr.mxu0 0.0
        %301 = vmatpush1.msra.mxu0 0.0
        %302 = vmatprep.subr.mxu0 0.0
        %303 = vmatpush1.msra.mxu0 0.0
        %304 = vmatprep.subr.mxu0 0.0
        %305 = vmatpush1.msra.mxu0 0.0
        %306 = vmatprep.subr.mxu0 0.0
        %307 = vmatpush1.msra.mxu0 0.0
        %308 = vmatprep.subr.mxu0 0.0
        %309 = vmatpush1.msra.mxu0 0.0
        %310 = vmatprep.subr.mxu0 0.0
        %311 = vmatpush1.msra.mxu0 0.0
        %312 = vmatprep.subr.mxu0 0.0
        %313 = vmatpush1.msra.mxu0 0.0
        %314 = vmatprep.subr.mxu0 0.0
        %315 = vmatpush1.msra.mxu0 0.0
        %316 = vmatprep.subr.mxu0 0.0
        %317 = vmatpush1.msra.mxu0 0.0
        %318 = vmatprep.subr.mxu0 0.0
        %319 = vmatpush1.msra.mxu0 0.0
        %320 = vmatprep.subr.mxu0 0.0
        %321 = vmatpush1.msra.mxu0 0.0
        %322 = vmatprep.subr.mxu0 0.0
        %323 = vmatpush1.msra.mxu0 0.0
        %324 = vmatprep.subr.mxu0 0.0
        %325 = vmatpush1.msra.mxu0 0.0
        %326 = vmatprep.subr.mxu0 0.0
        %327 = vmatpush1.msra.mxu0 0.0
        %328 = vmatprep.subr.mxu0 0.0
        %329 = vmatpush1.msra.mxu0 0.0
        %330 = vmatprep.subr.mxu0 0.0
        %331 = vmatpush1.msra.mxu0 0.0
        %332 = vmatprep.subr.mxu0 0.0
        %333 = vmatpush1.msra.mxu0 0.0
        %334 = vmatprep.subr.mxu0 0.0
        %335 = vmatpush1.msra.mxu0 0.0
        %336 = vmatprep.subr.mxu0 0.0
        %337 = vmatpush1.msra.mxu0 0.0
        %338 = vmatprep.subr.mxu0 0.0
        %339 = vmatpush1.msra.mxu0 0.0
        %340 = vmatprep.subr.mxu0 0.0
        %341 = vmatpush1.msra.mxu0 0.0
        %342 = vmatprep.subr.mxu0 0.0
        %343 = vmatpush1.msra.mxu0 0.0
        %344 = vmatprep.subr.mxu0 0.0
        %345 = vmatpush1.msra.mxu0 0.0
        %346 = vmatprep.subr.mxu0 0.0
        %347 = vmatpush1.msra.mxu0 0.0
        %348 = vmatprep.subr.mxu0 0.0
        %349 = vmatpush1.msra.mxu0 0.0
        %350 = vmatprep.subr.mxu0 0.0
        %351 = vmatpush1.msra.mxu0 0.0
        %352 = vmatprep.subr.mxu0 0.0
        %353 = vmatpush1.msra.mxu0 0.0
        %354 = vmatprep.subr.mxu0 0.0
        %355 = vmatpush1.msra.mxu0 0.0
        %356 = vmatprep.subr.mxu0 0.0
        %357 = vmatpush1.msra.mxu0 0.0
        %358 = vmatprep.mubr.f32.mxu0 0.0
        %359 = vmatmul.mubr.f32.gmra.mrb[0].mxu0 %v288
        %v360 = vpop.f32.mrb[0].mxu0
        %v361 = vadd.f32 0.0, %v360
        %v362 = vpop.f32.mrb[0].mxu0
        %363 = vdwg.mxu0
        %v364 = vmul.f32 %v361, %v361
        %365 = vadd.xlane.f32.xlu0 %v364
        %v366 = vpop.xlane.xlu0 %365
        %v367 = vmax.f32 %v366, 1e-15
        %v368 = vrsqrt.pop %v367
        %v369 = vmul.f32 %v366, %v368
        %v370 = vmin.f32 %v285, 0.9999999
        %v371 = vadd.f32 %v370, 1.0
        %v372 = vlog2.pop %v371
        %v373 = vmul.f32 %v372, 0.6931472
        %v374 = vsub.f32 1.0, %v370
        %v375 = vlog2.pop %v374
        %v376 = vmul.f32 %v375, 0.6931472
        %v377 = vsub.f32 %v373, %v376
        %v378 = vmul.f32 %v377, 0.5
        %v379 = vmul.f32 %v369, %v284
        %v380 = vmul.f32 %v379, %v378
        %v381 = vtanh.pop %v380
        %v382 = vmul.f32 %v361, %v368
        %v383 = vmul.f32 %v381, %v382
        %vm384 = vcmp.eq.f32.partialorder %v366, 0.0
        %v385 = vsel %vm384, 1, 0
        %vm386 = vcmp.eq.s32.totalorder %v385, 1
        %v387 = vsel %vm386, 0.0, %v383
        %v388 = vmax.f32 %v387, 0.0
        %v389 = vld [vmem:[#allocation2] sm:$0xff]
        %v390 = vld [vmem:[#allocation2 + $0x8] sm:$0xff]
        %v391 = vld [vmem:[#allocation2 + $0x10] sm:$0xff]
        %v392 = vld [vmem:[#allocation2 + $0x18] sm:$0xff]
        %v393 = vld [vmem:[#allocation2 + $0x20] sm:$0xff]
        %v394 = vld [vmem:[#allocation2 + $0x28] sm:$0xff]
        %v395 = vld [vmem:[#allocation2 + $0x30] sm:$0xff]
        %v396 = vld [vmem:[#allocation2 + $0x38] sm:$0xff]
        %v397 = vld [vmem:[#allocation2 + $0x40] sm:$0xff]
        %v398 = vld [vmem:[#allocation2 + $0x48] sm:$0xff]
        %v399 = vld [vmem:[#allocation2 + $0x50] sm:$0xff]
        %v400 = vld [vmem:[#allocation2 + $0x58] sm:$0xff]
        %v401 = vld [vmem:[#allocation2 + $0x60] sm:$0xff]
        %v402 = vld [vmem:[#allocation2 + $0x68] sm:$0xff]
        %v403 = vld [vmem:[#allocation2 + $0x70] sm:$0xff]
        %v404 = vld [vmem:[#allocation2 + $0x78] sm:$0xff]
        %v405 = vld [vmem:[%s3] sm:$0x1]
        %v407 = vlaneseq
        %v408 = vshrl.u32 %v407, 7
        %v409 = vsub.s32 0, %v408
        %v410 = vrot.slane %v405, %v409
        %412 = vmatprep.subr.mxu0 0.0
        %413 = vmatpush1.msra.mxu0 %v389
        %414 = vmatprep.subr.mxu0 0.0
        %415 = vmatpush1.msra.mxu0 %v390
        %416 = vmatprep.subr.mxu0 0.0
        %417 = vmatpush1.msra.mxu0 %v391
        %418 = vmatprep.subr.mxu0 0.0
        %419 = vmatpush1.msra.mxu0 %v392
        %420 = vmatprep.subr.mxu0 0.0
        %421 = vmatpush1.msra.mxu0 %v393
        %422 = vmatprep.subr.mxu0 0.0
        %423 = vmatpush1.msra.mxu0 %v394
        %424 = vmatprep.subr.mxu0 0.0
        %425 = vmatpush1.msra.mxu0 %v395
        %426 = vmatprep.subr.mxu0 0.0
        %427 = vmatpush1.msra.mxu0 %v396
        %428 = vmatprep.subr.mxu0 0.0
        %429 = vmatpush1.msra.mxu0 %v397
        %430 = vmatprep.subr.mxu0 0.0
        %431 = vmatpush1.msra.mxu0 %v398
        %432 = vmatprep.subr.mxu0 0.0
        %433 = vmatpush1.msra.mxu0 %v399
        %434 = vmatprep.subr.mxu0 0.0
        %435 = vmatpush1.msra.mxu0 %v400
        %436 = vmatprep.subr.mxu0 0.0
        %437 = vmatpush1.msra.mxu0 %v401
        %438 = vmatprep.subr.mxu0 0.0
        %439 = vmatpush1.msra.mxu0 %v402
        %440 = vmatprep.subr.mxu0 0.0
        %441 = vmatpush1.msra.mxu0 %v403
        %442 = vmatprep.subr.mxu0 0.0
        %443 = vmatpush1.msra.mxu0 %v404
        %444 = vmatprep.subr.mxu0 0.0
        %445 = vmatpush1.msra.mxu0 0.0
        %446 = vmatprep.subr.mxu0 0.0
        %447 = vmatpush1.msra.mxu0 0.0
        %448 = vmatprep.subr.mxu0 0.0
        %449 = vmatpush1.msra.mxu0 0.0
        %450 = vmatprep.subr.mxu0 0.0
        %451 = vmatpush1.msra.mxu0 0.0
        %452 = vmatprep.subr.mxu0 0.0
        %453 = vmatpush1.msra.mxu0 0.0
        %454 = vmatprep.subr.mxu0 0.0
        %455 = vmatpush1.msra.mxu0 0.0
        %456 = vmatprep.subr.mxu0 0.0
        %457 = vmatpush1.msra.mxu0 0.0
        %458 = vmatprep.subr.mxu0 0.0
        %459 = vmatpush1.msra.mxu0 0.0
        %460 = vmatprep.subr.mxu0 0.0
        %461 = vmatpush1.msra.mxu0 0.0
        %462 = vmatprep.subr.mxu0 0.0
        %463 = vmatpush1.msra.mxu0 0.0
        %464 = vmatprep.subr.mxu0 0.0
        %465 = vmatpush1.msra.mxu0 0.0
        %466 = vmatprep.subr.mxu0 0.0
        %467 = vmatpush1.msra.mxu0 0.0
        %468 = vmatprep.subr.mxu0 0.0
        %469 = vmatpush1.msra.mxu0 0.0
        %470 = vmatprep.subr.mxu0 0.0
        %471 = vmatpush1.msra.mxu0 0.0
        %472 = vmatprep.subr.mxu0 0.0
        %473 = vmatpush1.msra.mxu0 0.0
        %474 = vmatprep.subr.mxu0 0.0
        %475 = vmatpush1.msra.mxu0 0.0
        %476 = vmatprep.mubr.f32.mxu0 0.0
        %477 = vmatmul.mubr.f32.gmra.mrb[0].mxu0 %v388
        %v478 = vpop.f32.mrb[0].mxu0
        %v479 = vadd.f32 %v410, %v478
        %v480 = vpop.f32.mrb[0].mxu0
        %481 = vdwg.mxu0
        %v482 = vmax.f32 %v479, 0.0
        %s483 = scalar_lea.vmem [#allocation2], 128
        %v484 = vld [vmem:[%s483] sm:$0xff]
        %v485 = vld [vmem:[%s483 + $0x8] sm:$0xff]
        %v486 = vld [vmem:[%s483 + $0x10] sm:$0xff]
        %v487 = vld [vmem:[%s483 + $0x18] sm:$0xff]
        %v488 = vld [vmem:[%s483 + $0x20] sm:$0xff]
        %v489 = vld [vmem:[%s483 + $0x28] sm:$0xff]
        %v490 = vld [vmem:[%s483 + $0x30] sm:$0xff]
        %v491 = vld [vmem:[%s483 + $0x38] sm:$0xff]
        %v492 = vld [vmem:[%s483 + $0x40] sm:$0xff]
        %v493 = vld [vmem:[%s483 + $0x48] sm:$0xff]
        %v494 = vld [vmem:[%s483 + $0x50] sm:$0xff]
        %v495 = vld [vmem:[%s483 + $0x58] sm:$0xff]
        %v496 = vld [vmem:[%s483 + $0x60] sm:$0xff]
        %v497 = vld [vmem:[%s483 + $0x68] sm:$0xff]
        %v498 = vld [vmem:[%s483 + $0x70] sm:$0xff]
        %v499 = vld [vmem:[%s483 + $0x78] sm:$0xff]
        %s500 = scalar_lea.vmem %s3, 1
        %v501 = vld [vmem:[%s500] sm:$0x1]
        %v503 = vlaneseq
        %v504 = vshrl.u32 %v503, 7
        %v505 = vsub.s32 0, %v504
        %v506 = vrot.slane %v501, %v505
        %508 = vmatprep.subr.mxu0 0.0
        %509 = vmatpush1.msra.mxu0 %v484
        %510 = vmatprep.subr.mxu0 0.0
        %511 = vmatpush1.msra.mxu0 %v485
        %512 = vmatprep.subr.mxu0 0.0
        %513 = vmatpush1.msra.mxu0 %v486
        %514 = vmatprep.subr.mxu0 0.0
        %515 = vmatpush1.msra.mxu0 %v487
        %516 = vmatprep.subr.mxu0 0.0
        %517 = vmatpush1.msra.mxu0 %v488
        %518 = vmatprep.subr.mxu0 0.0
        %519 = vmatpush1.msra.mxu0 %v489
        %520 = vmatprep.subr.mxu0 0.0
        %521 = vmatpush1.msra.mxu0 %v490
        %522 = vmatprep.subr.mxu0 0.0
        %523 = vmatpush1.msra.mxu0 %v491
        %524 = vmatprep.subr.mxu0 0.0
        %525 = vmatpush1.msra.mxu0 %v492
        %526 = vmatprep.subr.mxu0 0.0
        %527 = vmatpush1.msra.mxu0 %v493
        %528 = vmatprep.subr.mxu0 0.0
        %529 = vmatpush1.msra.mxu0 %v494
        %530 = vmatprep.subr.mxu0 0.0
        %531 = vmatpush1.msra.mxu0 %v495
        %532 = vmatprep.subr.mxu0 0.0
        %533 = vmatpush1.msra.mxu0 %v496
        %534 = vmatprep.subr.mxu0 0.0
        %535 = vmatpush1.msra.mxu0 %v497
        %536 = vmatprep.subr.mxu0 0.0
        %537 = vmatpush1.msra.mxu0 %v498
        %538 = vmatprep.subr.mxu0 0.0
        %539 = vmatpush1.msra.mxu0 %v499
        %540 = vmatprep.subr.mxu0 0.0
        %541 = vmatpush1.msra.mxu0 0.0
        %542 = vmatprep.subr.mxu0 0.0
        %543 = vmatpush1.msra.mxu0 0.0
        %544 = vmatprep.subr.mxu0 0.0
        %545 = vmatpush1.msra.mxu0 0.0
        %546 = vmatprep.subr.mxu0 0.0
        %547 = vmatpush1.msra.mxu0 0.0
        %548 = vmatprep.subr.mxu0 0.0
        %549 = vmatpush1.msra.mxu0 0.0
        %550 = vmatprep.subr.mxu0 0.0
        %551 = vmatpush1.msra.mxu0 0.0
        %552 = vmatprep.subr.mxu0 0.0
        %553 = vmatpush1.msra.mxu0 0.0
        %554 = vmatprep.subr.mxu0 0.0
        %555 = vmatpush1.msra.mxu0 0.0
        %556 = vmatprep.subr.mxu0 0.0
        %557 = vmatpush1.msra.mxu0 0.0
        %558 = vmatprep.subr.mxu0 0.0
        %559 = vmatpush1.msra.mxu0 0.0
        %560 = vmatprep.subr.mxu0 0.0
        %561 = vmatpush1.msra.mxu0 0.0
        %562 = vmatprep.subr.mxu0 0.0
        %563 = vmatpush1.msra.mxu0 0.0
        %564 = vmatprep.subr.mxu0 0.0
        %565 = vmatpush1.msra.mxu0 0.0
        %566 = vmatprep.subr.mxu0 0.0
        %567 = vmatpush1.msra.mxu0 0.0
        %568 = vmatprep.subr.mxu0 0.0
        %569 = vmatpush1.msra.mxu0 0.0
        %570 = vmatprep.subr.mxu0 0.0
        %571 = vmatpush1.msra.mxu0 0.0
        %572 = vmatprep.mubr.f32.mxu0 0.0
        %573 = vmatmul.mubr.f32.gmra.mrb[0].mxu0 %v482
        %v574 = vpop.f32.mrb[0].mxu0
        %v575 = vadd.f32 %v506, %v574
        %v576 = vpop.f32.mrb[0].mxu0
        %577 = vdwg.mxu0
        %v578 = vmax.f32 %v575, 0.0
        %v579 = vld [vmem:[#allocation5] sm:$0xff]
        %v580 = vld [vmem:[#allocation5 + $0x8] sm:$0xff]
        %v581 = vld [vmem:[#allocation5 + $0x10] sm:$0xff]
        %v582 = vld [vmem:[#allocation5 + $0x18] sm:$0xff]
        %v583 = vld [vmem:[#allocation5 + $0x20] sm:$0xff]
        %v584 = vld [vmem:[#allocation5 + $0x28] sm:$0xff]
        %v585 = vld [vmem:[#allocation5 + $0x30] sm:$0xff]
        %v586 = vld [vmem:[#allocation5 + $0x38] sm:$0xff]
        %v587 = vld [vmem:[#allocation5 + $0x40] sm:$0xff]
        %v588 = vld [vmem:[#allocation5 + $0x48] sm:$0xff]
        %v589 = vld [vmem:[#allocation5 + $0x50] sm:$0xff]
        %v590 = vld [vmem:[#allocation5 + $0x58] sm:$0xff]
        %v591 = vld [vmem:[#allocation5 + $0x60] sm:$0xff]
        %v592 = vld [vmem:[#allocation5 + $0x68] sm:$0xff]
        %v593 = vld [vmem:[#allocation5 + $0x70] sm:$0xff]
        %v594 = vld [vmem:[#allocation5 + $0x78] sm:$0xff]
        %v595 = vld [vmem:[%s5] sm:$0x1]
        %v597 = vlaneseq
        %v598 = vshrl.u32 %v597, 7
        %v599 = vsub.s32 0, %v598
        %v600 = vrot.slane %v595, %v599
        %602 = vmatprep.subr.mxu0 0.0
        %603 = vmatpush1.msra.mxu0 %v579
        %604 = vmatprep.subr.mxu0 0.0
        %605 = vmatpush1.msra.mxu0 %v580
        %606 = vmatprep.subr.mxu0 0.0
        %607 = vmatpush1.msra.mxu0 %v581
        %608 = vmatprep.subr.mxu0 0.0
        %609 = vmatpush1.msra.mxu0 %v582
        %610 = vmatprep.subr.mxu0 0.0
        %611 = vmatpush1.msra.mxu0 %v583
        %612 = vmatprep.subr.mxu0 0.0
        %613 = vmatpush1.msra.mxu0 %v584
        %614 = vmatprep.subr.mxu0 0.0
        %615 = vmatpush1.msra.mxu0 %v585
        %616 = vmatprep.subr.mxu0 0.0
        %617 = vmatpush1.msra.mxu0 %v586
        %618 = vmatprep.subr.mxu0 0.0
        %619 = vmatpush1.msra.mxu0 %v587
        %620 = vmatprep.subr.mxu0 0.0
        %621 = vmatpush1.msra.mxu0 %v588
        %622 = vmatprep.subr.mxu0 0.0
        %623 = vmatpush1.msra.mxu0 %v589
        %624 = vmatprep.subr.mxu0 0.0
        %625 = vmatpush1.msra.mxu0 %v590
        %626 = vmatprep.subr.mxu0 0.0
        %627 = vmatpush1.msra.mxu0 %v591
        %628 = vmatprep.subr.mxu0 0.0
        %629 = vmatpush1.msra.mxu0 %v592
        %630 = vmatprep.subr.mxu0 0.0
        %631 = vmatpush1.msra.mxu0 %v593
        %632 = vmatprep.subr.mxu0 0.0
        %633 = vmatpush1.msra.mxu0 %v594
        %634 = vmatprep.subr.mxu0 0.0
        %635 = vmatpush1.msra.mxu0 0.0
        %636 = vmatprep.subr.mxu0 0.0
        %637 = vmatpush1.msra.mxu0 0.0
        %638 = vmatprep.subr.mxu0 0.0
        %639 = vmatpush1.msra.mxu0 0.0
        %640 = vmatprep.subr.mxu0 0.0
        %641 = vmatpush1.msra.mxu0 0.0
        %642 = vmatprep.subr.mxu0 0.0
        %643 = vmatpush1.msra.mxu0 0.0
        %644 = vmatprep.subr.mxu0 0.0
        %645 = vmatpush1.msra.mxu0 0.0
        %646 = vmatprep.subr.mxu0 0.0
        %647 = vmatpush1.msra.mxu0 0.0
        %648 = vmatprep.subr.mxu0 0.0
        %649 = vmatpush1.msra.mxu0 0.0
        %650 = vmatprep.subr.mxu0 0.0
        %651 = vmatpush1.msra.mxu0 0.0
        %652 = vmatprep.subr.mxu0 0.0
        %653 = vmatpush1.msra.mxu0 0.0
        %654 = vmatprep.subr.mxu0 0.0
        %655 = vmatpush1.msra.mxu0 0.0
        %656 = vmatprep.subr.mxu0 0.0
        %657 = vmatpush1.msra.mxu0 0.0
        %658 = vmatprep.subr.mxu0 0.0
        %659 = vmatpush1.msra.mxu0 0.0
        %660 = vmatprep.subr.mxu0 0.0
        %661 = vmatpush1.msra.mxu0 0.0
        %662 = vmatprep.subr.mxu0 0.0
        %663 = vmatpush1.msra.mxu0 0.0
        %664 = vmatprep.subr.mxu0 0.0
        %665 = vmatpush1.msra.mxu0 0.0
        %666 = vmatprep.mubr.f32.mxu0 0.0
        %667 = vmatmul.mubr.f32.gmra.mrb[0].mxu0 %v578
        %v668 = vpop.f32.mrb[0].mxu0
        %v669 = vadd.f32 %v600, %v668
        %v670 = vpop.f32.mrb[0].mxu0
        %671 = vdwg.mxu0
        %672 = vst [vmem:[%s272] sm:$0xff] %v669
        %s673 = sand.u32 %s161, 1
        %s674 = scalar_lea.sflag [#allocation4], %s673
        %s675 = sand.u32 %s161, 1
        %s676 = smul.addr %s675, 8
        %s677 = scalar_lea.vmem [#allocation7], %s676
        // Predicated region
        $region53: #{tpu_custom_call.1} parent=43 // pred_check
          %p678 = pneg %p171
        $region54: #{tpu_custom_call.1} parent=43 // pred_check_branch
          %680 = sbr.rel (%p678) target = $region56
        $region55: #{tpu_custom_call.1} parent=43 // pred_region
          %s682 = ssub.s32 128, 128
          %683 = vsyncadd %s674, %s682
          %s684 = smul.addr %s22, 128
          %s685 = scalar_lea.hbm %s6, %s684
          %s687 = sshll.u32 %s677, 4
          %s688 = int_to_ptr.vmem [resolvable:$true] %s687
          %690 = dma.vmem_to_hbm [thread:$0]  %s688, 128, %s685, %s674
        $region56: #{tpu_custom_call.1} parent=43 // pred_fallthru
          _
      $region44: #{tpu_custom_call.1} parent=5 // pred_fallthru
        _
      %p691 = scmp.le.s32.totalorder 2, %s17
      // Predicated region
      $region57: #{tpu_custom_call.1} parent=5 // pred_check
        %p692 = pneg %p691
      $region58: #{tpu_custom_call.1} parent=5 // pred_check_branch
        %694 = sbr.rel (%p692) target = $region60
      $region59: #{tpu_custom_call.1} parent=5 // pred_region
        %s695 = ssub.s32 %s17, 2
        // Predicated region
        $region61: #{tpu_custom_call.1} parent=59 // pred_check
          %p696 = pneg %p177
        $region62: #{tpu_custom_call.1} parent=59 // pred_check_branch
          %698 = sbr.rel (%p696) target = $region64
        $region63: #{tpu_custom_call.1} parent=59 // pred_region
          %s699 = sand.u32 %s162, 1
          %s700 = scalar_lea.sflag [#allocation4], %s699
          %s701 = sand.u32 %s162, 1
          %s702 = smul.addr %s701, 8
          %s703 = scalar_lea.vmem [#allocation7], %s702
          %704 = dma.done %s700, 128
        $region64: #{tpu_custom_call.1} parent=59 // pred_fallthru
          _
      $region60: #{tpu_custom_call.1} parent=5 // pred_fallthru
        _
    $region6: #{tpu_custom_call.1} parent=1 // loop_footer
      %s21 = sadd.s32 1, %s17
    $region7: #{tpu_custom_call.1} parent=1 // loop_footer_branch
      %16 = sbr.rel target = $region3
    $region8: #{tpu_custom_call.1} parent=1 // loop_exit
      _
    %705 = vsyncpa [#allocation3], 1
    %s706 = scalar_lea.sflag [#allocation3], 1
    %707 = vsyncpa %s706, 1
    %708 = vsyncpa [#allocation6], 1
    %709 = vsyncpa [#allocation4], 1
    %s710 = scalar_lea.sflag [#allocation4], 1
    %711 = vsyncpa %s710, 1

</llo_original>
